<compile_context>
chip_gen: v7x
topology: tpu7x:2x2x1
jax: 0.10.0
libtpu: 0.0.40
codegen_flags: <defaults>
</compile_context>

<pallas_src>
import functools
import math

import jax
import jax.numpy as jnp
from jax.experimental import pallas as pl
from jax.experimental.pallas import tpu as pltpu


def _embedder_kernel(x_ref, o_ref, *, freqs, include_input):
    """One tile of points, channel-first: x_ref (d, tile_n) -> o_ref (out_dim, tile_n)."""
    x = x_ref[...]  # (d, tile_n) float32, lane-dense (tile_n on the lane axis)

    parts = []
    if include_input:
        parts.append(x)
    # freqs are compile-time Python floats; sin/cos are dense EUP pushes over
    # full 128-lane vregs.
    for f in freqs:
        xf = x * f
        parts.append(jnp.sin(xf))
        parts.append(jnp.cos(xf))

    # Assemble the full (out_dim, tile_n) tile in registers and do a single
    # unmasked full-block store (no narrow masked vst.msk strips).
    result = jnp.concatenate(parts, axis=0)
    o_ref[...] = result.astype(o_ref.dtype)


def _pick_tile_n(n, max_tile=8192, min_tile=512):
    """Lane-axis tile size: multiple of 128, big (mem-bound), >=4 grid steps when possible."""
    n128 = pl.cdiv(n, 128) * 128
    if n128 <= max_tile:
        return n128                      # single (or exact) tile
    tile = max_tile
    # Prefer at least 4 grid steps so v7x's 2 TensorCores both get work.
    while tile > min_tile and pl.cdiv(n128, tile) < 4:
        tile //= 2
    return tile


class PallasEmbedder:
    """JAX/Pallas equivalent of the PyTorch Embedder module."""

    def __init__(self, **kwargs):
        self.kwargs = kwargs
        d = kwargs['input_dims']
        max_freq = kwargs['max_freq_log2']
        n_freqs = kwargs['num_freqs']
        if kwargs['log_sampling']:
            # 2.0 ** linspace(0, max_freq, N)
            freq_bands = [2.0 ** v for v in
                          jnp.linspace(0.0, max_freq, n_freqs).tolist()]
        else:
            freq_bands = jnp.linspace(2.0 ** 0.0, 2.0 ** max_freq,
                                      n_freqs).tolist()
        self.freqs = tuple(float(f) for f in freq_bands)
        self.include_input = bool(kwargs['include_input'])
        self.d = d
        # TODO(synk): periodic_fns is fixed to (sin, cos) (the standard NeRF
        # setting); arbitrary Python callables are not supported in-kernel.
        self.out_dim = (d if self.include_input else 0) + 2 * len(self.freqs) * d

    def __call__(self, inputs, *, tile_n=None, out_dtype=jnp.float32,
                 channel_first_output=False):
        orig_shape = inputs.shape
        d = self.d
        assert orig_shape[-1] == d

        # Channel-first, lane-dense presentation: (d, N) with N on the lane axis.
        x = inputs.reshape(-1, d).astype(jnp.float32).T   # (d, N)
        n = x.shape[1]

        tile = _pick_tile_n(n) if tile_n is None else tile_n
        grid = pl.cdiv(n, tile)   # no wrapper pad; boundary block is masked

        kernel = functools.partial(
            _embedder_kernel,
            freqs=self.freqs,
            include_input=self.include_input,
        )

        out = pl.pallas_call(
            kernel,
            out_shape=jax.ShapeDtypeStruct((self.out_dim, n), out_dtype),
            grid=(grid,),
            in_specs=[pl.BlockSpec((d, tile), lambda i: (0, i))],
            out_specs=pl.BlockSpec((self.out_dim, tile), lambda i: (0, i)),
            compiler_params=pltpu.CompilerParams(
                dimension_semantics=("parallel",)),
        )(x)

        if channel_first_output:
            # (out_dim, *batch) — skips the channel-last transpose entirely.
            return out.reshape(self.out_dim, *orig_shape[:-1])
        return out.T.reshape(*orig_shape[:-1], self.out_dim)


def reference_embed(x, freqs, include_input):
    parts = []
    if include_input:
        parts.append(x)
    for f in freqs:
        parts.append(jnp.sin(x * f))
        parts.append(jnp.cos(x * f))
    return jnp.concatenate(parts, axis=-1)


if __name__ == "__main__":
    # Standard NeRF positional-encoding configuration.
    num_freqs = 10
    embedder = PallasEmbedder(
        include_input=True,
        input_dims=3,
        max_freq_log2=num_freqs - 1,
        num_freqs=num_freqs,
        log_sampling=True,
        periodic_fns=("sin", "cos"),
    )

    key = jax.random.PRNGKey(0)
    # batch of 2 ray-bundles, 128 points each, 3-D coordinates
    x = jax.random.uniform(key, (2, 128, 3), dtype=jnp.float32,
                           minval=-1.0, maxval=1.0)

    out = embedder(x)
    out = jax.block_until_ready(out)

    ref = reference_embed(x, embedder.freqs, embedder.include_input)
    assert out.shape == (2, 128, embedder.out_dim), out.shape
    assert embedder.out_dim == 3 + 2 * num_freqs * 3
    err = float(jnp.max(jnp.abs(out - ref)))
    if not math.isfinite(err) or err > 1e-5:
        raise AssertionError(f"mismatch vs reference, max abs err = {err}")

    print("KERNEL_OK")
</pallas_src>

<mosaic_0001>
module attributes {stable_mosaic.version = 11 : i64} {
  func.func @_embedder_kernel(%arg0: i32, %arg1: memref<3x256xf32, #tpu.memory_space<vmem>>, %arg2: memref<63x256xf32, #tpu.memory_space<vmem>>) attributes {dimension_semantics = [#tpu.dimension_semantics<parallel>], iteration_bounds = array<i64: 1>, scalar_prefetch = 0 : i64, scratch_operands = 0 : i64, tpu.core_type = #tpu.core_type<tc>, window_params = [{transform_indices = @transform_0, window_bounds = array<i64: 3, 256>}, {transform_indices = @transform_1, window_bounds = array<i64: 63, 256>}]} {
    %c0 = arith.constant 0 : index
    %c0_0 = arith.constant 0 : index
    %0 = vector.load %arg1[%c0, %c0_0] : memref<3x256xf32, #tpu.memory_space<vmem>>, vector<3x256xf32>
    %cst = arith.constant 1.000000e+00 : f32
    %1 = vector.broadcast %cst : f32 to vector<3x256xf32>
    %2 = arith.mulf %0, %1 : vector<3x256xf32>
    %3 = math.sin %2 : vector<3x256xf32>
    %4 = math.cos %2 : vector<3x256xf32>
    %cst_1 = arith.constant 2.000000e+00 : f32
    %5 = vector.broadcast %cst_1 : f32 to vector<3x256xf32>
    %6 = arith.mulf %0, %5 : vector<3x256xf32>
    %7 = math.sin %6 : vector<3x256xf32>
    %8 = math.cos %6 : vector<3x256xf32>
    %cst_2 = arith.constant 4.000000e+00 : f32
    %9 = vector.broadcast %cst_2 : f32 to vector<3x256xf32>
    %10 = arith.mulf %0, %9 : vector<3x256xf32>
    %11 = math.sin %10 : vector<3x256xf32>
    %12 = math.cos %10 : vector<3x256xf32>
    %cst_3 = arith.constant 8.000000e+00 : f32
    %13 = vector.broadcast %cst_3 : f32 to vector<3x256xf32>
    %14 = arith.mulf %0, %13 : vector<3x256xf32>
    %15 = math.sin %14 : vector<3x256xf32>
    %16 = math.cos %14 : vector<3x256xf32>
    %cst_4 = arith.constant 1.600000e+01 : f32
    %17 = vector.broadcast %cst_4 : f32 to vector<3x256xf32>
    %18 = arith.mulf %0, %17 : vector<3x256xf32>
    %19 = math.sin %18 : vector<3x256xf32>
    %20 = math.cos %18 : vector<3x256xf32>
    %cst_5 = arith.constant 3.200000e+01 : f32
    %21 = vector.broadcast %cst_5 : f32 to vector<3x256xf32>
    %22 = arith.mulf %0, %21 : vector<3x256xf32>
    %23 = math.sin %22 : vector<3x256xf32>
    %24 = math.cos %22 : vector<3x256xf32>
    %cst_6 = arith.constant 6.400000e+01 : f32
    %25 = vector.broadcast %cst_6 : f32 to vector<3x256xf32>
    %26 = arith.mulf %0, %25 : vector<3x256xf32>
    %27 = math.sin %26 : vector<3x256xf32>
    %28 = math.cos %26 : vector<3x256xf32>
    %cst_7 = arith.constant 1.280000e+02 : f32
    %29 = vector.broadcast %cst_7 : f32 to vector<3x256xf32>
    %30 = arith.mulf %0, %29 : vector<3x256xf32>
    %31 = math.sin %30 : vector<3x256xf32>
    %32 = math.cos %30 : vector<3x256xf32>
    %cst_8 = arith.constant 2.560000e+02 : f32
    %33 = vector.broadcast %cst_8 : f32 to vector<3x256xf32>
    %34 = arith.mulf %0, %33 : vector<3x256xf32>
    %35 = math.sin %34 : vector<3x256xf32>
    %36 = math.cos %34 : vector<3x256xf32>
    %cst_9 = arith.constant 5.120000e+02 : f32
    %37 = vector.broadcast %cst_9 : f32 to vector<3x256xf32>
    %38 = arith.mulf %0, %37 : vector<3x256xf32>
    %39 = math.sin %38 : vector<3x256xf32>
    %40 = math.cos %38 : vector<3x256xf32>
    %41 = tpu.concatenate %0, %3, %4, %7, %8, %11, %12, %15, %16, %19, %20, %23, %24, %27, %28, %31 in 0 : vector<3x256xf32>, vector<3x256xf32>, vector<3x256xf32>, vector<3x256xf32>, vector<3x256xf32>, vector<3x256xf32>, vector<3x256xf32>, vector<3x256xf32>, vector<3x256xf32>, vector<3x256xf32>, vector<3x256xf32>, vector<3x256xf32>, vector<3x256xf32>, vector<3x256xf32>, vector<3x256xf32>, vector<3x256xf32> -> vector<48x256xf32>
    %42 = tpu.concatenate %32, %35, %36, %39, %40 in 0 : vector<3x256xf32>, vector<3x256xf32>, vector<3x256xf32>, vector<3x256xf32>, vector<3x256xf32> -> vector<15x256xf32>
    %43 = tpu.concatenate %41, %42 in 0 : vector<48x256xf32>, vector<15x256xf32> -> vector<63x256xf32>
    %c0_10 = arith.constant 0 : index
    %c0_11 = arith.constant 0 : index
    %44 = vector.load %arg2[%c0_10, %c0_11] : memref<63x256xf32, #tpu.memory_space<vmem>>, vector<63x256xf32>
    tpu.vector_store %arg2[%c0_10, %c0_11], %43 {strides = array<i32>} : memref<63x256xf32, #tpu.memory_space<vmem>>, vector<63x256xf32>,
    return
  }
  func.func @transform_0(%arg0: i32) -> (i32, i32) {
    %c0_i32 = arith.constant 0 : i32
    %c0_i32_0 = arith.constant 0 : i32
    return %c0_i32, %arg0 : i32, i32
  }
  func.func @transform_1(%arg0: i32) -> (i32, i32) {
    %c0_i32 = arith.constant 0 : i32
    %c0_i32_0 = arith.constant 0 : i32
    return %c0_i32, %arg0 : i32, i32
  }
}

</mosaic_0001>

<llo_original>
// kernel: tpu_custom_call.1
$region0: #{tpu_custom_call.1}
  #allocation0 [shape = 'u32[]', space=smem, size = 0x4, offset = 0x4, fixed_abs, tag = 'smem constant byte address 0x4 - core index']
  #allocation1 [shape = 'u32[144,128]{1,0:T(1,128)}', space=vmem, size = 0x12000, scoped, tag = 'internal scratch']
  %s0 = inlined_call_operand.hbm [shape: f32[3,256], index: 0, kind: input, shape index: {}]
  %s1 = inlined_call_operand.hbm [shape: f32[63,256], index: 1, kind: output, shape index: {}]
  %s2 = sld [smem:[#allocation0]]
  $region18: #{tpu_custom_call.1} parent=0
    _
  %s4 = ssub.s32 1, %s2
  %s5 = scalar_select 0, %s4, %s2
  $region1: #{tpu_custom_call.1} parent=0
    #allocation2 [shape = 'u8[4096]{0}', space=vmem, size = 0x1000, scoped, tag = 'input window, operand 0, single buffered']
    #allocation3 [shape = 's32[1]{0}', space=sflag, size = 0x4, scoped, tag = 'scoped memory for tpu_custom_call.1']
    #allocation4 [shape = 's32[1]{0}', space=sflag, size = 0x4, scoped, tag = 'scoped memory for tpu_custom_call.1']
    #allocation5 [shape = 'u8[65536]{0}', space=vmem, size = 0x10000, scoped, tag = 'output window, operand 0, single buffered']
    %6 = vsyncpa [#allocation3], 0
    %7 = vsyncpa [#allocation4], 0
    // Predicated region
    $region2: #{tpu_custom_call.1} parent=1 // pred_check
      _
    $region3: #{tpu_custom_call.1} parent=1 // pred_check_branch
      %9 = sbr.rel (0) target = $region5
    $region4: #{tpu_custom_call.1} parent=1 // pred_region
      %s11 = ssub.s32 128, 128
      %12 = vsyncadd [#allocation3], %s11
      %s14 = sshll.u32 [#allocation2], 4
      %s15 = int_to_ptr.vmem [resolvable:$true] %s14
      %17 = dma.hbm_to_vmem [thread:$0]  %s0, 128, %s15, [#allocation3]
    $region5: #{tpu_custom_call.1} parent=1 // pred_fallthru
      _
    // Predicated region
    $region6: #{tpu_custom_call.1} parent=1 // pred_check
      _
    $region7: #{tpu_custom_call.1} parent=1 // pred_check_branch
      %19 = sbr.rel (0) target = $region9
    $region8: #{tpu_custom_call.1} parent=1 // pred_region
      %20 = dma.done [#allocation3], 128
    $region9: #{tpu_custom_call.1} parent=1 // pred_fallthru
      _
    %v21 = vld [vmem:[#allocation2] sm:$0x77]
    %v22 = vand.u32 2147483647, %v21
    %vm23 = vcmp.le.f32.partialorder %v22, 0.7853982
    %vm24 = vcmp.lt.s32.totalorder %v21, 0
    %v25 = vand.u32 %v21, 2139095040
    %v26 = vshrl.u32 %v25, 23
    %v27 = vsub.s32 %v26, 127
    %v28 = vand.u32 2147483647, %v21
    %v29 = vand.u32 %v28, 8388607
    %v30 = vor.u32 %v29, 8388608
    %v31 = vsub.s32 0, %v30
    %v32 = vadd.s32 %v27, 1
    %vm33 = vcmp.gt.s32.totalorder %v32, 0
    %v34 = vsel %vm33, %v32, 0
    %v35 = vshrl.u32 %v34, 5
    %v36 = vand.u32 %v34, 31
    %v37 = vsub.s32 32, %v36
    %v38 = vshrl.u32 683565275, %v37
    %v39 = vshll.u32 683565275, %v36
    %v40 = vshrl.u32 2475754826, %v37
    %v41 = vor.u32 %v39, %v40
    %v42 = vshll.u32 2475754826, %v36
    %v43 = vshrl.u32 2131351028, %v37
    %v44 = vor.u32 %v42, %v43
    %v45 = vshll.u32 2131351028, %v36
    %v46 = vshrl.u32 2102212464, %v37
    %v47 = vor.u32 %v45, %v46
    %v48 = vshll.u32 2102212464, %v36
    %v49 = vshrl.u32 920167782, %v37
    %v50 = vor.u32 %v48, %v49
    %v51 = vshll.u32 920167782, %v36
    %v52 = vshrl.u32 1326507024, %v37
    %v53 = vor.u32 %v51, %v52
    %vm54 = vcmp.lt.s32.totalorder %v35, 1
    %vm55 = vcmp.lt.s32.totalorder %v35, 2
    %vm56 = vcmp.lt.s32.totalorder %v35, 3
    %vm57 = vcmp.lt.s32.totalorder %v35, 4
    %v58 = vsel %vm54, %v38, %v41
    %v59 = vsel %vm57, %v47, 2102212464
    %v60 = vsel %vm56, %v44, %v59
    %v61 = vsel %vm55, %v58, %v60
    %v62 = vsel %vm54, %v41, %v44
    %v63 = vsel %vm57, %v50, 920167782
    %v64 = vsel %vm56, %v47, %v63
    %v65 = vsel %vm55, %v62, %v64
    %v66 = vsel %vm54, %v44, %v47
    %v67 = vsel %vm57, %v53, 1326507024
    %v68 = vsel %vm56, %v50, %v67
    %v69 = vsel %vm55, %v66, %v68
    %v70 = vshll.u32 %v30, 8
    %v71 = vmul.u32.u64.compose %v70, %v69
    %v72 = vextract.low.u32 %v71
    %v73 = vextract.high.u32 %v71
    %v74 = vmul.u32.u64.compose %v70, %v65
    %v75 = vextract.low.u32 %v74
    %v76 = vextract.high.u32 %v74
    %v77 = vmul.u32 %v70, %v61
    %v78 = vadd.s32 %v73, %v75
    %vm79 = vc.u32 %v73, %v75
    %v80 = vadd.s32 %v76, 1
    %v81 = vsel %vm79, %v80, %v76
    %v82 = vadd.s32 %v77, %v81
    %v83 = vadd.s32 %v82, 536870912
    %v84 = vshrl.u32 %v83, 30
    %v85 = vshll.u32 %v84, 30
    %v86 = vsub.s32 %v82, %v85
    %vm87 = vcmp.lt.s32.totalorder %v86, 0
    %v88 = vsub.s32 0, %v86
    %v89 = vsel %vm87, %v88, %v86
    %v90 = vclz %v89
    %v91 = vsub.s32 %v90, 2
    %vm92 = vcmp.gt.s32.totalorder 0, %v91
    %v93 = vsel %vm92, 0, %v91
    %v94 = vsub.s32 32, %v93
    %v95 = vshll.u32 %v86, %v93
    %v96 = vshrl.u32 %v78, %v94
    %v97 = vor.u32 %v95, %v96
    %v98 = vsub.s32 4294967266, %v93
    %v99 = vadd.s32 %v98, 127
    %v100 = vshll.u32 %v99, 23
    %v101 = vor.u32 4788187, %v100
    %v102 = vand.u32 2147483647, %v101
    %v104 = vcvt.s32.f32 %v97
    %v105 = vmul.f32 %v104, %v102
    %v106 = vxor.u32 %v105, 2147483648
    %v107 = vsel %vm24, %v106, %v105
    %v108 = vsub.s32 4, %v84
    %v109 = vsel %vm24, %v108, %v84
    %v110 = vsel %vm23, %v21, %v107
    %v111 = vsel %vm23, 0, %v109
    %v112 = vcosq.f32.pop %v110
    %v113 = vsinq.f32.pop %v110
    %vm114 = vweird.f32 %v21
    %v115 = vadd.s32 %v111, 3
    %v116 = vand.u32 %v115, 3
    %vm117 = vcmp.lt.s32.totalorder %v116, 2
    %vm118 = vcmp.eq.s32.totalorder %v116, 0
    %v119 = vxor.u32 %v113, 2147483648
    %v120 = vsel %vm118, %v112, %v119
    %vm121 = vcmp.eq.s32.totalorder %v116, 2
    %v122 = vxor.u32 %v112, 2147483648
    %v123 = vsel %vm121, %v122, %v113
    %v124 = vsel %vm117, %v120, %v123
    %v125 = vsel %vm114, nan, %v124
    %v126 = vand.u32 2147483647, %v21
    %vm127 = vcmp.le.f32.partialorder %v126, 0.7853982
    %vm128 = vcmp.lt.s32.totalorder %v21, 0
    %v129 = vand.u32 %v21, 2139095040
    %v130 = vshrl.u32 %v129, 23
    %v131 = vsub.s32 %v130, 127
    %v132 = vand.u32 2147483647, %v21
    %v133 = vand.u32 %v132, 8388607
    %v134 = vor.u32 %v133, 8388608
    %v135 = vsub.s32 0, %v134
    %v136 = vadd.s32 %v131, 1
    %vm137 = vcmp.gt.s32.totalorder %v136, 0
    %v138 = vsel %vm137, %v136, 0
    %v139 = vshrl.u32 %v138, 5
    %v140 = vand.u32 %v138, 31
    %v141 = vsub.s32 32, %v140
    %v142 = vshrl.u32 683565275, %v141
    %v143 = vshll.u32 683565275, %v140
    %v144 = vshrl.u32 2475754826, %v141
    %v145 = vor.u32 %v143, %v144
    %v146 = vshll.u32 2475754826, %v140
    %v147 = vshrl.u32 2131351028, %v141
    %v148 = vor.u32 %v146, %v147
    %v149 = vshll.u32 2131351028, %v140
    %v150 = vshrl.u32 2102212464, %v141
    %v151 = vor.u32 %v149, %v150
    %v152 = vshll.u32 2102212464, %v140
    %v153 = vshrl.u32 920167782, %v141
    %v154 = vor.u32 %v152, %v153
    %v155 = vshll.u32 920167782, %v140
    %v156 = vshrl.u32 1326507024, %v141
    %v157 = vor.u32 %v155, %v156
    %vm158 = vcmp.lt.s32.totalorder %v139, 1
    %vm159 = vcmp.lt.s32.totalorder %v139, 2
    %vm160 = vcmp.lt.s32.totalorder %v139, 3
    %vm161 = vcmp.lt.s32.totalorder %v139, 4
    %v162 = vsel %vm158, %v142, %v145
    %v163 = vsel %vm161, %v151, 2102212464
    %v164 = vsel %vm160, %v148, %v163
    %v165 = vsel %vm159, %v162, %v164
    %v166 = vsel %vm158, %v145, %v148
    %v167 = vsel %vm161, %v154, 920167782
    %v168 = vsel %vm160, %v151, %v167
    %v169 = vsel %vm159, %v166, %v168
    %v170 = vsel %vm158, %v148, %v151
    %v171 = vsel %vm161, %v157, 1326507024
    %v172 = vsel %vm160, %v154, %v171
    %v173 = vsel %vm159, %v170, %v172
    %v174 = vshll.u32 %v134, 8
    %v175 = vmul.u32.u64.compose %v174, %v173
    %v176 = vextract.low.u32 %v175
    %v177 = vextract.high.u32 %v175
    %v178 = vmul.u32.u64.compose %v174, %v169
    %v179 = vextract.low.u32 %v178
    %v180 = vextract.high.u32 %v178
    %v181 = vmul.u32 %v174, %v165
    %v182 = vadd.s32 %v177, %v179
    %vm183 = vc.u32 %v177, %v179
    %v184 = vadd.s32 %v180, 1
    %v185 = vsel %vm183, %v184, %v180
    %v186 = vadd.s32 %v181, %v185
    %v187 = vadd.s32 %v186, 536870912
    %v188 = vshrl.u32 %v187, 30
    %v189 = vshll.u32 %v188, 30
    %v190 = vsub.s32 %v186, %v189
    %vm191 = vcmp.lt.s32.totalorder %v190, 0
    %v192 = vsub.s32 0, %v190
    %v193 = vsel %vm191, %v192, %v190
    %v194 = vclz %v193
    %v195 = vsub.s32 %v194, 2
    %vm196 = vcmp.gt.s32.totalorder 0, %v195
    %v197 = vsel %vm196, 0, %v195
    %v198 = vsub.s32 32, %v197
    %v199 = vshll.u32 %v190, %v197
    %v200 = vshrl.u32 %v182, %v198
    %v201 = vor.u32 %v199, %v200
    %v202 = vsub.s32 4294967266, %v197
    %v203 = vadd.s32 %v202, 127
    %v204 = vshll.u32 %v203, 23
    %v205 = vor.u32 4788187, %v204
    %v206 = vand.u32 2147483647, %v205
    %v208 = vcvt.s32.f32 %v201
    %v209 = vmul.f32 %v208, %v206
    %v210 = vxor.u32 %v209, 2147483648
    %v211 = vsel %vm128, %v210, %v209
    %v212 = vsub.s32 4, %v188
    %v213 = vsel %vm128, %v212, %v188
    %v214 = vsel %vm127, %v21, %v211
    %v215 = vsel %vm127, 0, %v213
    %v216 = vcosq.f32.pop %v214
    %v217 = vsinq.f32.pop %v214
    %vm218 = vweird.f32 %v21
    %v219 = vand.u32 %v215, 3
    %vm220 = vcmp.lt.s32.totalorder %v219, 2
    %vm221 = vcmp.eq.s32.totalorder %v219, 0
    %v222 = vxor.u32 %v217, 2147483648
    %v223 = vsel %vm221, %v216, %v222
    %vm224 = vcmp.eq.s32.totalorder %v219, 2
    %v225 = vxor.u32 %v216, 2147483648
    %v226 = vsel %vm224, %v225, %v217
    %v227 = vsel %vm220, %v223, %v226
    %v228 = vsel %vm218, nan, %v227
    %v229 = vmul.f32 %v21, 2.0
    %v230 = vand.u32 2147483647, %v229
    %vm231 = vcmp.le.f32.partialorder %v230, 0.7853982
    %vm232 = vcmp.lt.s32.totalorder %v229, 0
    %v233 = vand.u32 %v229, 2139095040
    %v234 = vshrl.u32 %v233, 23
    %v235 = vsub.s32 %v234, 127
    %v236 = vand.u32 2147483647, %v229
    %v237 = vand.u32 %v236, 8388607
    %v238 = vor.u32 %v237, 8388608
    %v239 = vsub.s32 0, %v238
    %v240 = vadd.s32 %v235, 1
    %vm241 = vcmp.gt.s32.totalorder %v240, 0
    %v242 = vsel %vm241, %v240, 0
    %v243 = vshrl.u32 %v242, 5
    %v244 = vand.u32 %v242, 31
    %v245 = vsub.s32 32, %v244
    %v246 = vshrl.u32 683565275, %v245
    %v247 = vshll.u32 683565275, %v244
    %v248 = vshrl.u32 2475754826, %v245
    %v249 = vor.u32 %v247, %v248
    %v250 = vshll.u32 2475754826, %v244
    %v251 = vshrl.u32 2131351028, %v245
    %v252 = vor.u32 %v250, %v251
    %v253 = vshll.u32 2131351028, %v244
    %v254 = vshrl.u32 2102212464, %v245
    %v255 = vor.u32 %v253, %v254
    %v256 = vshll.u32 2102212464, %v244
    %v257 = vshrl.u32 920167782, %v245
    %v258 = vor.u32 %v256, %v257
    %v259 = vshll.u32 920167782, %v244
    %v260 = vshrl.u32 1326507024, %v245
    %v261 = vor.u32 %v259, %v260
    %vm262 = vcmp.lt.s32.totalorder %v243, 1
    %vm263 = vcmp.lt.s32.totalorder %v243, 2
    %vm264 = vcmp.lt.s32.totalorder %v243, 3
    %vm265 = vcmp.lt.s32.totalorder %v243, 4
    %v266 = vsel %vm262, %v246, %v249
    %v267 = vsel %vm265, %v255, 2102212464
    %v268 = vsel %vm264, %v252, %v267
    %v269 = vsel %vm263, %v266, %v268
    %v270 = vsel %vm262, %v249, %v252
    %v271 = vsel %vm265, %v258, 920167782
    %v272 = vsel %vm264, %v255, %v271
    %v273 = vsel %vm263, %v270, %v272
    %v274 = vsel %vm262, %v252, %v255
    %v275 = vsel %vm265, %v261, 1326507024
    %v276 = vsel %vm264, %v258, %v275
    %v277 = vsel %vm263, %v274, %v276
    %v278 = vshll.u32 %v238, 8
    %v279 = vmul.u32.u64.compose %v278, %v277
    %v280 = vextract.low.u32 %v279
    %v281 = vextract.high.u32 %v279
    %v282 = vmul.u32.u64.compose %v278, %v273
    %v283 = vextract.low.u32 %v282
    %v284 = vextract.high.u32 %v282
    %v285 = vmul.u32 %v278, %v269
    %v286 = vadd.s32 %v281, %v283
    %vm287 = vc.u32 %v281, %v283
    %v288 = vadd.s32 %v284, 1
    %v289 = vsel %vm287, %v288, %v284
    %v290 = vadd.s32 %v285, %v289
    %v291 = vadd.s32 %v290, 536870912
    %v292 = vshrl.u32 %v291, 30
    %v293 = vshll.u32 %v292, 30
    %v294 = vsub.s32 %v290, %v293
    %vm295 = vcmp.lt.s32.totalorder %v294, 0
    %v296 = vsub.s32 0, %v294
    %v297 = vsel %vm295, %v296, %v294
    %v298 = vclz %v297
    %v299 = vsub.s32 %v298, 2
    %vm300 = vcmp.gt.s32.totalorder 0, %v299
    %v301 = vsel %vm300, 0, %v299
    %v302 = vsub.s32 32, %v301
    %v303 = vshll.u32 %v294, %v301
    %v304 = vshrl.u32 %v286, %v302
    %v305 = vor.u32 %v303, %v304
    %v306 = vsub.s32 4294967266, %v301
    %v307 = vadd.s32 %v306, 127
    %v308 = vshll.u32 %v307, 23
    %v309 = vor.u32 4788187, %v308
    %v310 = vand.u32 2147483647, %v309
    %v312 = vcvt.s32.f32 %v305
    %v313 = vmul.f32 %v312, %v310
    %v314 = vxor.u32 %v313, 2147483648
    %v315 = vsel %vm232, %v314, %v313
    %v316 = vsub.s32 4, %v292
    %v317 = vsel %vm232, %v316, %v292
    %v318 = vsel %vm231, %v229, %v315
    %v319 = vsel %vm231, 0, %v317
    %v320 = vcosq.f32.pop %v318
    %v321 = vsinq.f32.pop %v318
    %vm322 = vweird.f32 %v229
    %v323 = vadd.s32 %v319, 3
    %v324 = vand.u32 %v323, 3
    %vm325 = vcmp.lt.s32.totalorder %v324, 2
    %vm326 = vcmp.eq.s32.totalorder %v324, 0
    %v327 = vxor.u32 %v321, 2147483648
    %v328 = vsel %vm326, %v320, %v327
    %vm329 = vcmp.eq.s32.totalorder %v324, 2
    %v330 = vxor.u32 %v320, 2147483648
    %v331 = vsel %vm329, %v330, %v321
    %v332 = vsel %vm325, %v328, %v331
    %v333 = vsel %vm322, nan, %v332
    %v334 = vand.u32 2147483647, %v229
    %vm335 = vcmp.le.f32.partialorder %v334, 0.7853982
    %vm336 = vcmp.lt.s32.totalorder %v229, 0
    %v337 = vand.u32 %v229, 2139095040
    %v338 = vshrl.u32 %v337, 23
    %v339 = vsub.s32 %v338, 127
    %v340 = vand.u32 2147483647, %v229
    %v341 = vand.u32 %v340, 8388607
    %v342 = vor.u32 %v341, 8388608
    %v343 = vsub.s32 0, %v342
    %v344 = vadd.s32 %v339, 1
    %vm345 = vcmp.gt.s32.totalorder %v344, 0
    %v346 = vsel %vm345, %v344, 0
    %v347 = vshrl.u32 %v346, 5
    %v348 = vand.u32 %v346, 31
    %v349 = vsub.s32 32, %v348
    %v350 = vshrl.u32 683565275, %v349
    %v351 = vshll.u32 683565275, %v348
    %v352 = vshrl.u32 2475754826, %v349
    %v353 = vor.u32 %v351, %v352
    %v354 = vshll.u32 2475754826, %v348
    %v355 = vshrl.u32 2131351028, %v349
    %v356 = vor.u32 %v354, %v355
    %v357 = vshll.u32 2131351028, %v348
    %v358 = vshrl.u32 2102212464, %v349
    %v359 = vor.u32 %v357, %v358
    %v360 = vshll.u32 2102212464, %v348
    %v361 = vshrl.u32 920167782, %v349
    %v362 = vor.u32 %v360, %v361
    %v363 = vshll.u32 920167782, %v348
    %v364 = vshrl.u32 1326507024, %v349
    %v365 = vor.u32 %v363, %v364
    %vm366 = vcmp.lt.s32.totalorder %v347, 1
    %vm367 = vcmp.lt.s32.totalorder %v347, 2
    %vm368 = vcmp.lt.s32.totalorder %v347, 3
    %vm369 = vcmp.lt.s32.totalorder %v347, 4
    %v370 = vsel %vm366, %v350, %v353
    %v371 = vsel %vm369, %v359, 2102212464
    %v372 = vsel %vm368, %v356, %v371
    %v373 = vsel %vm367, %v370, %v372
    %v374 = vsel %vm366, %v353, %v356
    %v375 = vsel %vm369, %v362, 920167782
    %v376 = vsel %vm368, %v359, %v375
    %v377 = vsel %vm367, %v374, %v376
    %v378 = vsel %vm366, %v356, %v359
    %v379 = vsel %vm369, %v365, 1326507024
    %v380 = vsel %vm368, %v362, %v379
    %v381 = vsel %vm367, %v378, %v380
    %v382 = vshll.u32 %v342, 8
    %v383 = vmul.u32.u64.compose %v382, %v381
    %v384 = vextract.low.u32 %v383
    %v385 = vextract.high.u32 %v383
    %v386 = vmul.u32.u64.compose %v382, %v377
    %v387 = vextract.low.u32 %v386
    %v388 = vextract.high.u32 %v386
    %v389 = vmul.u32 %v382, %v373
    %v390 = vadd.s32 %v385, %v387
    %vm391 = vc.u32 %v385, %v387
    %v392 = vadd.s32 %v388, 1
    %v393 = vsel %vm391, %v392, %v388
    %v394 = vadd.s32 %v389, %v393
    %v395 = vadd.s32 %v394, 536870912
    %v396 = vshrl.u32 %v395, 30
    %v397 = vshll.u32 %v396, 30
    %v398 = vsub.s32 %v394, %v397
    %vm399 = vcmp.lt.s32.totalorder %v398, 0
    %v400 = vsub.s32 0, %v398
    %v401 = vsel %vm399, %v400, %v398
    %v402 = vclz %v401
    %v403 = vsub.s32 %v402, 2
    %vm404 = vcmp.gt.s32.totalorder 0, %v403
    %v405 = vsel %vm404, 0, %v403
    %v406 = vsub.s32 32, %v405
    %v407 = vshll.u32 %v398, %v405
    %v408 = vshrl.u32 %v390, %v406
    %v409 = vor.u32 %v407, %v408
    %v410 = vsub.s32 4294967266, %v405
    %v411 = vadd.s32 %v410, 127
    %v412 = vshll.u32 %v411, 23
    %v413 = vor.u32 4788187, %v412
    %v414 = vand.u32 2147483647, %v413
    %v416 = vcvt.s32.f32 %v409
    %v417 = vmul.f32 %v416, %v414
    %v418 = vxor.u32 %v417, 2147483648
    %v419 = vsel %vm336, %v418, %v417
    %v420 = vsub.s32 4, %v396
    %v421 = vsel %vm336, %v420, %v396
    %v422 = vsel %vm335, %v229, %v419
    %v423 = vsel %vm335, 0, %v421
    %v424 = vcosq.f32.pop %v422
    %v425 = vsinq.f32.pop %v422
    %vm426 = vweird.f32 %v229
    %v427 = vand.u32 %v423, 3
    %vm428 = vcmp.lt.s32.totalorder %v427, 2
    %vm429 = vcmp.eq.s32.totalorder %v427, 0
    %v430 = vxor.u32 %v425, 2147483648
    %v431 = vsel %vm429, %v424, %v430
    %vm432 = vcmp.eq.s32.totalorder %v427, 2
    %v433 = vxor.u32 %v424, 2147483648
    %v434 = vsel %vm432, %v433, %v425
    %v435 = vsel %vm428, %v431, %v434
    %v436 = vsel %vm426, nan, %v435
    %v437 = vmul.f32 %v21, 4.0
    %v438 = vand.u32 2147483647, %v437
    %vm439 = vcmp.le.f32.partialorder %v438, 0.7853982
    %vm440 = vcmp.lt.s32.totalorder %v437, 0
    %v441 = vand.u32 %v437, 2139095040
    %v442 = vshrl.u32 %v441, 23
    %v443 = vsub.s32 %v442, 127
    %v444 = vand.u32 2147483647, %v437
    %v445 = vand.u32 %v444, 8388607
    %v446 = vor.u32 %v445, 8388608
    %v447 = vsub.s32 0, %v446
    %v448 = vadd.s32 %v443, 1
    %vm449 = vcmp.gt.s32.totalorder %v448, 0
    %v450 = vsel %vm449, %v448, 0
    %v451 = vshrl.u32 %v450, 5
    %v452 = vand.u32 %v450, 31
    %v453 = vsub.s32 32, %v452
    %v454 = vshrl.u32 683565275, %v453
    %v455 = vshll.u32 683565275, %v452
    %v456 = vshrl.u32 2475754826, %v453
    %v457 = vor.u32 %v455, %v456
    %v458 = vshll.u32 2475754826, %v452
    %v459 = vshrl.u32 2131351028, %v453
    %v460 = vor.u32 %v458, %v459
    %v461 = vshll.u32 2131351028, %v452
    %v462 = vshrl.u32 2102212464, %v453
    %v463 = vor.u32 %v461, %v462
    %v464 = vshll.u32 2102212464, %v452
    %v465 = vshrl.u32 920167782, %v453
    %v466 = vor.u32 %v464, %v465
    %v467 = vshll.u32 920167782, %v452
    %v468 = vshrl.u32 1326507024, %v453
    %v469 = vor.u32 %v467, %v468
    %vm470 = vcmp.lt.s32.totalorder %v451, 1
    %vm471 = vcmp.lt.s32.totalorder %v451, 2
    %vm472 = vcmp.lt.s32.totalorder %v451, 3
    %vm473 = vcmp.lt.s32.totalorder %v451, 4
    %v474 = vsel %vm470, %v454, %v457
    %v475 = vsel %vm473, %v463, 2102212464
    %v476 = vsel %vm472, %v460, %v475
    %v477 = vsel %vm471, %v474, %v476
    %v478 = vsel %vm470, %v457, %v460
    %v479 = vsel %vm473, %v466, 920167782
    %v480 = vsel %vm472, %v463, %v479
    %v481 = vsel %vm471, %v478, %v480
    %v482 = vsel %vm470, %v460, %v463
    %v483 = vsel %vm473, %v469, 1326507024
    %v484 = vsel %vm472, %v466, %v483
    %v485 = vsel %vm471, %v482, %v484
    %v486 = vshll.u32 %v446, 8
    %v487 = vmul.u32.u64.compose %v486, %v485
    %v488 = vextract.low.u32 %v487
    %v489 = vextract.high.u32 %v487
    %v490 = vmul.u32.u64.compose %v486, %v481
    %v491 = vextract.low.u32 %v490
    %v492 = vextract.high.u32 %v490
    %v493 = vmul.u32 %v486, %v477
    %v494 = vadd.s32 %v489, %v491
    %vm495 = vc.u32 %v489, %v491
    %v496 = vadd.s32 %v492, 1
    %v497 = vsel %vm495, %v496, %v492
    %v498 = vadd.s32 %v493, %v497
    %v499 = vadd.s32 %v498, 536870912
    %v500 = vshrl.u32 %v499, 30
    %v501 = vshll.u32 %v500, 30
    %v502 = vsub.s32 %v498, %v501
    %vm503 = vcmp.lt.s32.totalorder %v502, 0
    %v504 = vsub.s32 0, %v502
    %v505 = vsel %vm503, %v504, %v502
    %v506 = vclz %v505
    %v507 = vsub.s32 %v506, 2
    %vm508 = vcmp.gt.s32.totalorder 0, %v507
    %v509 = vsel %vm508, 0, %v507
    %v510 = vsub.s32 32, %v509
    %v511 = vshll.u32 %v502, %v509
    %v512 = vshrl.u32 %v494, %v510
    %v513 = vor.u32 %v511, %v512
    %v514 = vsub.s32 4294967266, %v509
    %v515 = vadd.s32 %v514, 127
    %v516 = vshll.u32 %v515, 23
    %v517 = vor.u32 4788187, %v516
    %v518 = vand.u32 2147483647, %v517
    %v520 = vcvt.s32.f32 %v513
    %v521 = vmul.f32 %v520, %v518
    %v522 = vxor.u32 %v521, 2147483648
    %v523 = vsel %vm440, %v522, %v521
    %v524 = vsub.s32 4, %v500
    %v525 = vsel %vm440, %v524, %v500
    %v526 = vsel %vm439, %v437, %v523
    %v527 = vsel %vm439, 0, %v525
    %v528 = vcosq.f32.pop %v526
    %v529 = vsinq.f32.pop %v526
    %vm530 = vweird.f32 %v437
    %v531 = vadd.s32 %v527, 3
    %v532 = vand.u32 %v531, 3
    %vm533 = vcmp.lt.s32.totalorder %v532, 2
    %vm534 = vcmp.eq.s32.totalorder %v532, 0
    %v535 = vxor.u32 %v529, 2147483648
    %v536 = vsel %vm534, %v528, %v535
    %vm537 = vcmp.eq.s32.totalorder %v532, 2
    %v538 = vxor.u32 %v528, 2147483648
    %v539 = vsel %vm537, %v538, %v529
    %v540 = vsel %vm533, %v536, %v539
    %v541 = vsel %vm530, nan, %v540
    %v542 = vand.u32 2147483647, %v437
    %vm543 = vcmp.le.f32.partialorder %v542, 0.7853982
    %vm544 = vcmp.lt.s32.totalorder %v437, 0
    %v545 = vand.u32 %v437, 2139095040
    %v546 = vshrl.u32 %v545, 23
    %v547 = vsub.s32 %v546, 127
    %v548 = vand.u32 2147483647, %v437
    %v549 = vand.u32 %v548, 8388607
    %v550 = vor.u32 %v549, 8388608
    %v551 = vsub.s32 0, %v550
    %v552 = vadd.s32 %v547, 1
    %vm553 = vcmp.gt.s32.totalorder %v552, 0
    %v554 = vsel %vm553, %v552, 0
    %v555 = vshrl.u32 %v554, 5
    %v556 = vand.u32 %v554, 31
    %v557 = vsub.s32 32, %v556
    %v558 = vshrl.u32 683565275, %v557
    %v559 = vshll.u32 683565275, %v556
    %v560 = vshrl.u32 2475754826, %v557
    %v561 = vor.u32 %v559, %v560
    %v562 = vshll.u32 2475754826, %v556
    %v563 = vshrl.u32 2131351028, %v557
    %v564 = vor.u32 %v562, %v563
    %v565 = vshll.u32 2131351028, %v556
    %v566 = vshrl.u32 2102212464, %v557
    %v567 = vor.u32 %v565, %v566
    %v568 = vshll.u32 2102212464, %v556
    %v569 = vshrl.u32 920167782, %v557
    %v570 = vor.u32 %v568, %v569
    %v571 = vshll.u32 920167782, %v556
    %v572 = vshrl.u32 1326507024, %v557
    %v573 = vor.u32 %v571, %v572
    %vm574 = vcmp.lt.s32.totalorder %v555, 1
    %vm575 = vcmp.lt.s32.totalorder %v555, 2
    %vm576 = vcmp.lt.s32.totalorder %v555, 3
    %vm577 = vcmp.lt.s32.totalorder %v555, 4
    %v578 = vsel %vm574, %v558, %v561
    %v579 = vsel %vm577, %v567, 2102212464
    %v580 = vsel %vm576, %v564, %v579
    %v581 = vsel %vm575, %v578, %v580
    %v582 = vsel %vm574, %v561, %v564
    %v583 = vsel %vm577, %v570, 920167782
    %v584 = vsel %vm576, %v567, %v583
    %v585 = vsel %vm575, %v582, %v584
    %v586 = vsel %vm574, %v564, %v567
    %v587 = vsel %vm577, %v573, 1326507024
    %v588 = vsel %vm576, %v570, %v587
    %v589 = vsel %vm575, %v586, %v588
    %v590 = vshll.u32 %v550, 8
    %v591 = vmul.u32.u64.compose %v590, %v589
    %v592 = vextract.low.u32 %v591
    %v593 = vextract.high.u32 %v591
    %v594 = vmul.u32.u64.compose %v590, %v585
    %v595 = vextract.low.u32 %v594
    %v596 = vextract.high.u32 %v594
    %v597 = vmul.u32 %v590, %v581
    %v598 = vadd.s32 %v593, %v595
    %vm599 = vc.u32 %v593, %v595
    %v600 = vadd.s32 %v596, 1
    %v601 = vsel %vm599, %v600, %v596
    %v602 = vadd.s32 %v597, %v601
    %v603 = vadd.s32 %v602, 536870912
    %v604 = vshrl.u32 %v603, 30
    %v605 = vshll.u32 %v604, 30
    %v606 = vsub.s32 %v602, %v605
    %vm607 = vcmp.lt.s32.totalorder %v606, 0
    %v608 = vsub.s32 0, %v606
    %v609 = vsel %vm607, %v608, %v606
    %v610 = vclz %v609
    %v611 = vsub.s32 %v610, 2
    %vm612 = vcmp.gt.s32.totalorder 0, %v611
    %v613 = vsel %vm612, 0, %v611
    %v614 = vsub.s32 32, %v613
    %v615 = vshll.u32 %v606, %v613
    %v616 = vshrl.u32 %v598, %v614
    %v617 = vor.u32 %v615, %v616
    %v618 = vsub.s32 4294967266, %v613
    %v619 = vadd.s32 %v618, 127
    %v620 = vshll.u32 %v619, 23
    %v621 = vor.u32 4788187, %v620
    %v622 = vand.u32 2147483647, %v621
    %v624 = vcvt.s32.f32 %v617
    %v625 = vmul.f32 %v624, %v622
    %v626 = vxor.u32 %v625, 2147483648
    %v627 = vsel %vm544, %v626, %v625
    %v628 = vsub.s32 4, %v604
    %v629 = vsel %vm544, %v628, %v604
    %v630 = vsel %vm543, %v437, %v627
    %v631 = vsel %vm543, 0, %v629
    %v632 = vcosq.f32.pop %v630
    %v633 = vsinq.f32.pop %v630
    %vm634 = vweird.f32 %v437
    %v635 = vand.u32 %v631, 3
    %vm636 = vcmp.lt.s32.totalorder %v635, 2
    %vm637 = vcmp.eq.s32.totalorder %v635, 0
    %v638 = vxor.u32 %v633, 2147483648
    %v639 = vsel %vm637, %v632, %v638
    %vm640 = vcmp.eq.s32.totalorder %v635, 2
    %v641 = vxor.u32 %v632, 2147483648
    %v642 = vsel %vm640, %v641, %v633
    %v643 = vsel %vm636, %v639, %v642
    %v644 = vsel %vm634, nan, %v643
    %v645 = vmul.f32 %v21, 8.0
    %v646 = vand.u32 2147483647, %v645
    %vm647 = vcmp.le.f32.partialorder %v646, 0.7853982
    %vm648 = vcmp.lt.s32.totalorder %v645, 0
    %v649 = vand.u32 %v645, 2139095040
    %v650 = vshrl.u32 %v649, 23
    %v651 = vsub.s32 %v650, 127
    %v652 = vand.u32 2147483647, %v645
    %v653 = vand.u32 %v652, 8388607
    %v654 = vor.u32 %v653, 8388608
    %v655 = vsub.s32 0, %v654
    %v656 = vadd.s32 %v651, 1
    %vm657 = vcmp.gt.s32.totalorder %v656, 0
    %v658 = vsel %vm657, %v656, 0
    %v659 = vshrl.u32 %v658, 5
    %v660 = vand.u32 %v658, 31
    %v661 = vsub.s32 32, %v660
    %v662 = vshrl.u32 683565275, %v661
    %v663 = vshll.u32 683565275, %v660
    %v664 = vshrl.u32 2475754826, %v661
    %v665 = vor.u32 %v663, %v664
    %v666 = vshll.u32 2475754826, %v660
    %v667 = vshrl.u32 2131351028, %v661
    %v668 = vor.u32 %v666, %v667
    %v669 = vshll.u32 2131351028, %v660
    %v670 = vshrl.u32 2102212464, %v661
    %v671 = vor.u32 %v669, %v670
    %v672 = vshll.u32 2102212464, %v660
    %v673 = vshrl.u32 920167782, %v661
    %v674 = vor.u32 %v672, %v673
    %v675 = vshll.u32 920167782, %v660
    %v676 = vshrl.u32 1326507024, %v661
    %v677 = vor.u32 %v675, %v676
    %vm678 = vcmp.lt.s32.totalorder %v659, 1
    %vm679 = vcmp.lt.s32.totalorder %v659, 2
    %vm680 = vcmp.lt.s32.totalorder %v659, 3
    %vm681 = vcmp.lt.s32.totalorder %v659, 4
    %v682 = vsel %vm678, %v662, %v665
    %v683 = vsel %vm681, %v671, 2102212464
    %v684 = vsel %vm680, %v668, %v683
    %v685 = vsel %vm679, %v682, %v684
    %v686 = vsel %vm678, %v665, %v668
    %v687 = vsel %vm681, %v674, 920167782
    %v688 = vsel %vm680, %v671, %v687
    %v689 = vsel %vm679, %v686, %v688
    %v690 = vsel %vm678, %v668, %v671
    %v691 = vsel %vm681, %v677, 1326507024
    %v692 = vsel %vm680, %v674, %v691
    %v693 = vsel %vm679, %v690, %v692
    %v694 = vshll.u32 %v654, 8
    %v695 = vmul.u32.u64.compose %v694, %v693
    %v696 = vextract.low.u32 %v695
    %v697 = vextract.high.u32 %v695
    %v698 = vmul.u32.u64.compose %v694, %v689
    %v699 = vextract.low.u32 %v698
    %v700 = vextract.high.u32 %v698
    %v701 = vmul.u32 %v694, %v685
    %v702 = vadd.s32 %v697, %v699
    %vm703 = vc.u32 %v697, %v699
    %v704 = vadd.s32 %v700, 1
    %v705 = vsel %vm703, %v704, %v700
    %v706 = vadd.s32 %v701, %v705
    %v707 = vadd.s32 %v706, 536870912
    %v708 = vshrl.u32 %v707, 30
    %v709 = vshll.u32 %v708, 30
    %v710 = vsub.s32 %v706, %v709
    %vm711 = vcmp.lt.s32.totalorder %v710, 0
    %v712 = vsub.s32 0, %v710
    %v713 = vsel %vm711, %v712, %v710
    %v714 = vclz %v713
    %v715 = vsub.s32 %v714, 2
    %vm716 = vcmp.gt.s32.totalorder 0, %v715
    %v717 = vsel %vm716, 0, %v715
    %v718 = vsub.s32 32, %v717
    %v719 = vshll.u32 %v710, %v717
    %v720 = vshrl.u32 %v702, %v718
    %v721 = vor.u32 %v719, %v720
    %v722 = vsub.s32 4294967266, %v717
    %v723 = vadd.s32 %v722, 127
    %v724 = vshll.u32 %v723, 23
    %v725 = vor.u32 4788187, %v724
    %v726 = vand.u32 2147483647, %v725
    %v728 = vcvt.s32.f32 %v721
    %v729 = vmul.f32 %v728, %v726
    %v730 = vxor.u32 %v729, 2147483648
    %v731 = vsel %vm648, %v730, %v729
    %v732 = vsub.s32 4, %v708
    %v733 = vsel %vm648, %v732, %v708
    %v734 = vsel %vm647, %v645, %v731
    %v735 = vsel %vm647, 0, %v733
    %v736 = vcosq.f32.pop %v734
    %v737 = vsinq.f32.pop %v734
    %vm738 = vweird.f32 %v645
    %v739 = vadd.s32 %v735, 3
    %v740 = vand.u32 %v739, 3
    %vm741 = vcmp.lt.s32.totalorder %v740, 2
    %vm742 = vcmp.eq.s32.totalorder %v740, 0
    %v743 = vxor.u32 %v737, 2147483648
    %v744 = vsel %vm742, %v736, %v743
    %vm745 = vcmp.eq.s32.totalorder %v740, 2
    %v746 = vxor.u32 %v736, 2147483648
    %v747 = vsel %vm745, %v746, %v737
    %v748 = vsel %vm741, %v744, %v747
    %v749 = vsel %vm738, nan, %v748
    %v750 = vand.u32 2147483647, %v645
    %vm751 = vcmp.le.f32.partialorder %v750, 0.7853982
    %vm752 = vcmp.lt.s32.totalorder %v645, 0
    %v753 = vand.u32 %v645, 2139095040
    %v754 = vshrl.u32 %v753, 23
    %v755 = vsub.s32 %v754, 127
    %v756 = vand.u32 2147483647, %v645
    %v757 = vand.u32 %v756, 8388607
    %v758 = vor.u32 %v757, 8388608
    %v759 = vsub.s32 0, %v758
    %v760 = vadd.s32 %v755, 1
    %vm761 = vcmp.gt.s32.totalorder %v760, 0
    %v762 = vsel %vm761, %v760, 0
    %v763 = vshrl.u32 %v762, 5
    %v764 = vand.u32 %v762, 31
    %v765 = vsub.s32 32, %v764
    %v766 = vshrl.u32 683565275, %v765
    %v767 = vshll.u32 683565275, %v764
    %v768 = vshrl.u32 2475754826, %v765
    %v769 = vor.u32 %v767, %v768
    %v770 = vshll.u32 2475754826, %v764
    %v771 = vshrl.u32 2131351028, %v765
    %v772 = vor.u32 %v770, %v771
    %v773 = vshll.u32 2131351028, %v764
    %v774 = vshrl.u32 2102212464, %v765
    %v775 = vor.u32 %v773, %v774
    %v776 = vshll.u32 2102212464, %v764
    %v777 = vshrl.u32 920167782, %v765
    %v778 = vor.u32 %v776, %v777
    %v779 = vshll.u32 920167782, %v764
    %v780 = vshrl.u32 1326507024, %v765
    %v781 = vor.u32 %v779, %v780
    %vm782 = vcmp.lt.s32.totalorder %v763, 1
    %vm783 = vcmp.lt.s32.totalorder %v763, 2
    %vm784 = vcmp.lt.s32.totalorder %v763, 3
    %vm785 = vcmp.lt.s32.totalorder %v763, 4
    %v786 = vsel %vm782, %v766, %v769
    %v787 = vsel %vm785, %v775, 2102212464
    %v788 = vsel %vm784, %v772, %v787
    %v789 = vsel %vm783, %v786, %v788
    %v790 = vsel %vm782, %v769, %v772
    %v791 = vsel %vm785, %v778, 920167782
    %v792 = vsel %vm784, %v775, %v791
    %v793 = vsel %vm783, %v790, %v792
    %v794 = vsel %vm782, %v772, %v775
    %v795 = vsel %vm785, %v781, 1326507024
    %v796 = vsel %vm784, %v778, %v795
    %v797 = vsel %vm783, %v794, %v796
    %v798 = vshll.u32 %v758, 8
    %v799 = vmul.u32.u64.compose %v798, %v797
    %v800 = vextract.low.u32 %v799
    %v801 = vextract.high.u32 %v799
    %v802 = vmul.u32.u64.compose %v798, %v793
    %v803 = vextract.low.u32 %v802
    %v804 = vextract.high.u32 %v802
    %v805 = vmul.u32 %v798, %v789
    %v806 = vadd.s32 %v801, %v803
    %vm807 = vc.u32 %v801, %v803
    %v808 = vadd.s32 %v804, 1
    %v809 = vsel %vm807, %v808, %v804
    %v810 = vadd.s32 %v805, %v809
    %v811 = vadd.s32 %v810, 536870912
    %v812 = vshrl.u32 %v811, 30
    %v813 = vshll.u32 %v812, 30
    %v814 = vsub.s32 %v810, %v813
    %vm815 = vcmp.lt.s32.totalorder %v814, 0
    %v816 = vsub.s32 0, %v814
    %v817 = vsel %vm815, %v816, %v814
    %v818 = vclz %v817
    %v819 = vsub.s32 %v818, 2
    %vm820 = vcmp.gt.s32.totalorder 0, %v819
    %v821 = vsel %vm820, 0, %v819
    %v822 = vsub.s32 32, %v821
    %v823 = vshll.u32 %v814, %v821
    %v824 = vshrl.u32 %v806, %v822
    %v825 = vor.u32 %v823, %v824
    %v826 = vsub.s32 4294967266, %v821
    %v827 = vadd.s32 %v826, 127
    %v828 = vshll.u32 %v827, 23
    %v829 = vor.u32 4788187, %v828
    %v830 = vand.u32 2147483647, %v829
    %v832 = vcvt.s32.f32 %v825
    %v833 = vmul.f32 %v832, %v830
    %v834 = vxor.u32 %v833, 2147483648
    %v835 = vsel %vm752, %v834, %v833
    %v836 = vsub.s32 4, %v812
    %v837 = vsel %vm752, %v836, %v812
    %v838 = vsel %vm751, %v645, %v835
    %v839 = vsel %vm751, 0, %v837
    %v840 = vcosq.f32.pop %v838
    %v841 = vsinq.f32.pop %v838
    %vm842 = vweird.f32 %v645
    %v843 = vand.u32 %v839, 3
    %vm844 = vcmp.lt.s32.totalorder %v843, 2
    %vm845 = vcmp.eq.s32.totalorder %v843, 0
    %v846 = vxor.u32 %v841, 2147483648
    %v847 = vsel %vm845, %v840, %v846
    %vm848 = vcmp.eq.s32.totalorder %v843, 2
    %v849 = vxor.u32 %v840, 2147483648
    %v850 = vsel %vm848, %v849, %v841
    %v851 = vsel %vm844, %v847, %v850
    %v852 = vsel %vm842, nan, %v851
    %v853 = vmul.f32 %v21, 16.0
    %v854 = vand.u32 2147483647, %v853
    %vm855 = vcmp.le.f32.partialorder %v854, 0.7853982
    %vm856 = vcmp.lt.s32.totalorder %v853, 0
    %v857 = vand.u32 %v853, 2139095040
    %v858 = vshrl.u32 %v857, 23
    %v859 = vsub.s32 %v858, 127
    %v860 = vand.u32 2147483647, %v853
    %v861 = vand.u32 %v860, 8388607
    %v862 = vor.u32 %v861, 8388608
    %v863 = vsub.s32 0, %v862
    %v864 = vadd.s32 %v859, 1
    %vm865 = vcmp.gt.s32.totalorder %v864, 0
    %v866 = vsel %vm865, %v864, 0
    %v867 = vshrl.u32 %v866, 5
    %v868 = vand.u32 %v866, 31
    %v869 = vsub.s32 32, %v868
    %v870 = vshrl.u32 683565275, %v869
    %v871 = vshll.u32 683565275, %v868
    %v872 = vshrl.u32 2475754826, %v869
    %v873 = vor.u32 %v871, %v872
    %v874 = vshll.u32 2475754826, %v868
    %v875 = vshrl.u32 2131351028, %v869
    %v876 = vor.u32 %v874, %v875
    %v877 = vshll.u32 2131351028, %v868
    %v878 = vshrl.u32 2102212464, %v869
    %v879 = vor.u32 %v877, %v878
    %v880 = vshll.u32 2102212464, %v868
    %v881 = vshrl.u32 920167782, %v869
    %v882 = vor.u32 %v880, %v881
    %v883 = vshll.u32 920167782, %v868
    %v884 = vshrl.u32 1326507024, %v869
    %v885 = vor.u32 %v883, %v884
    %vm886 = vcmp.lt.s32.totalorder %v867, 1
    %vm887 = vcmp.lt.s32.totalorder %v867, 2
    %vm888 = vcmp.lt.s32.totalorder %v867, 3
    %vm889 = vcmp.lt.s32.totalorder %v867, 4
    %v890 = vsel %vm886, %v870, %v873
    %v891 = vsel %vm889, %v879, 2102212464
    %v892 = vsel %vm888, %v876, %v891
    %v893 = vsel %vm887, %v890, %v892
    %v894 = vsel %vm886, %v873, %v876
    %v895 = vsel %vm889, %v882, 920167782
    %v896 = vsel %vm888, %v879, %v895
    %v897 = vsel %vm887, %v894, %v896
    %v898 = vsel %vm886, %v876, %v879
    %v899 = vsel %vm889, %v885, 1326507024
    %v900 = vsel %vm888, %v882, %v899
    %v901 = vsel %vm887, %v898, %v900
    %v902 = vshll.u32 %v862, 8
    %v903 = vmul.u32.u64.compose %v902, %v901
    %v904 = vextract.low.u32 %v903
    %v905 = vextract.high.u32 %v903
    %v906 = vmul.u32.u64.compose %v902, %v897
    %v907 = vextract.low.u32 %v906
    %v908 = vextract.high.u32 %v906
    %v909 = vmul.u32 %v902, %v893
    %v910 = vadd.s32 %v905, %v907
    %vm911 = vc.u32 %v905, %v907
    %v912 = vadd.s32 %v908, 1
    %v913 = vsel %vm911, %v912, %v908
    %v914 = vadd.s32 %v909, %v913
    %v915 = vadd.s32 %v914, 536870912
    %v916 = vshrl.u32 %v915, 30
    %v917 = vshll.u32 %v916, 30
    %v918 = vsub.s32 %v914, %v917
    %vm919 = vcmp.lt.s32.totalorder %v918, 0
    %v920 = vsub.s32 0, %v918
    %v921 = vsel %vm919, %v920, %v918
    %v922 = vclz %v921
    %v923 = vsub.s32 %v922, 2
    %vm924 = vcmp.gt.s32.totalorder 0, %v923
    %v925 = vsel %vm924, 0, %v923
    %v926 = vsub.s32 32, %v925
    %v927 = vshll.u32 %v918, %v925
    %v928 = vshrl.u32 %v910, %v926
    %v929 = vor.u32 %v927, %v928
    %v930 = vsub.s32 4294967266, %v925
    %v931 = vadd.s32 %v930, 127
    %v932 = vshll.u32 %v931, 23
    %v933 = vor.u32 4788187, %v932
    %v934 = vand.u32 2147483647, %v933
    %v936 = vcvt.s32.f32 %v929
    %v937 = vmul.f32 %v936, %v934
    %v938 = vxor.u32 %v937, 2147483648
    %v939 = vsel %vm856, %v938, %v937
    %v940 = vsub.s32 4, %v916
    %v941 = vsel %vm856, %v940, %v916
    %v942 = vsel %vm855, %v853, %v939
    %v943 = vsel %vm855, 0, %v941
    %v944 = vcosq.f32.pop %v942
    %v945 = vsinq.f32.pop %v942
    %vm946 = vweird.f32 %v853
    %v947 = vadd.s32 %v943, 3
    %v948 = vand.u32 %v947, 3
    %vm949 = vcmp.lt.s32.totalorder %v948, 2
    %vm950 = vcmp.eq.s32.totalorder %v948, 0
    %v951 = vxor.u32 %v945, 2147483648
    %v952 = vsel %vm950, %v944, %v951
    %vm953 = vcmp.eq.s32.totalorder %v948, 2
    %v954 = vxor.u32 %v944, 2147483648
    %v955 = vsel %vm953, %v954, %v945
    %v956 = vsel %vm949, %v952, %v955
    %v957 = vsel %vm946, nan, %v956
    %v958 = vand.u32 2147483647, %v853
    %vm959 = vcmp.le.f32.partialorder %v958, 0.7853982
    %vm960 = vcmp.lt.s32.totalorder %v853, 0
    %v961 = vand.u32 %v853, 2139095040
    %v962 = vshrl.u32 %v961, 23
    %v963 = vsub.s32 %v962, 127
    %v964 = vand.u32 2147483647, %v853
    %v965 = vand.u32 %v964, 8388607
    %v966 = vor.u32 %v965, 8388608
    %v967 = vsub.s32 0, %v966
    %v968 = vadd.s32 %v963, 1
    %vm969 = vcmp.gt.s32.totalorder %v968, 0
    %v970 = vsel %vm969, %v968, 0
    %v971 = vshrl.u32 %v970, 5
    %v972 = vand.u32 %v970, 31
    %v973 = vsub.s32 32, %v972
    %v974 = vshrl.u32 683565275, %v973
    %v975 = vshll.u32 683565275, %v972
    %v976 = vshrl.u32 2475754826, %v973
    %v977 = vor.u32 %v975, %v976
    %v978 = vshll.u32 2475754826, %v972
    %v979 = vshrl.u32 2131351028, %v973
    %v980 = vor.u32 %v978, %v979
    %v981 = vshll.u32 2131351028, %v972
    %v982 = vshrl.u32 2102212464, %v973
    %v983 = vor.u32 %v981, %v982
    %v984 = vshll.u32 2102212464, %v972
    %v985 = vshrl.u32 920167782, %v973
    %v986 = vor.u32 %v984, %v985
    %v987 = vshll.u32 920167782, %v972
    %v988 = vshrl.u32 1326507024, %v973
    %v989 = vor.u32 %v987, %v988
    %vm990 = vcmp.lt.s32.totalorder %v971, 1
    %vm991 = vcmp.lt.s32.totalorder %v971, 2
    %vm992 = vcmp.lt.s32.totalorder %v971, 3
    %vm993 = vcmp.lt.s32.totalorder %v971, 4
    %v994 = vsel %vm990, %v974, %v977
    %v995 = vsel %vm993, %v983, 2102212464
    %v996 = vsel %vm992, %v980, %v995
    %v997 = vsel %vm991, %v994, %v996
    %v998 = vsel %vm990, %v977, %v980
    %v999 = vsel %vm993, %v986, 920167782
    %v1000 = vsel %vm992, %v983, %v999
    %v1001 = vsel %vm991, %v998, %v1000
    %v1002 = vsel %vm990, %v980, %v983
    %v1003 = vsel %vm993, %v989, 1326507024
    %v1004 = vsel %vm992, %v986, %v1003
    %v1005 = vsel %vm991, %v1002, %v1004
    %v1006 = vshll.u32 %v966, 8
    %v1007 = vmul.u32.u64.compose %v1006, %v1005
    %v1008 = vextract.low.u32 %v1007
    %v1009 = vextract.high.u32 %v1007
    %v1010 = vmul.u32.u64.compose %v1006, %v1001
    %v1011 = vextract.low.u32 %v1010
    %v1012 = vextract.high.u32 %v1010
    %v1013 = vmul.u32 %v1006, %v997
    %v1014 = vadd.s32 %v1009, %v1011
    %vm1015 = vc.u32 %v1009, %v1011
    %v1016 = vadd.s32 %v1012, 1
    %v1017 = vsel %vm1015, %v1016, %v1012
    %v1018 = vadd.s32 %v1013, %v1017
    %v1019 = vadd.s32 %v1018, 536870912
    %v1020 = vshrl.u32 %v1019, 30
    %v1021 = vshll.u32 %v1020, 30
    %v1022 = vsub.s32 %v1018, %v1021
    %vm1023 = vcmp.lt.s32.totalorder %v1022, 0
    %v1024 = vsub.s32 0, %v1022
    %v1025 = vsel %vm1023, %v1024, %v1022
    %v1026 = vclz %v1025
    %v1027 = vsub.s32 %v1026, 2
    %vm1028 = vcmp.gt.s32.totalorder 0, %v1027
    %v1029 = vsel %vm1028, 0, %v1027
    %v1030 = vsub.s32 32, %v1029
    %v1031 = vshll.u32 %v1022, %v1029
    %v1032 = vshrl.u32 %v1014, %v1030
    %v1033 = vor.u32 %v1031, %v1032
    %v1034 = vsub.s32 4294967266, %v1029
    %v1035 = vadd.s32 %v1034, 127
    %v1036 = vshll.u32 %v1035, 23
    %v1037 = vor.u32 4788187, %v1036
    %v1038 = vand.u32 2147483647, %v1037
    %v1040 = vcvt.s32.f32 %v1033
    %v1041 = vmul.f32 %v1040, %v1038
    %v1042 = vxor.u32 %v1041, 2147483648
    %v1043 = vsel %vm960, %v1042, %v1041
    %v1044 = vsub.s32 4, %v1020
    %v1045 = vsel %vm960, %v1044, %v1020
    %v1046 = vsel %vm959, %v853, %v1043
    %v1047 = vsel %vm959, 0, %v1045
    %v1048 = vcosq.f32.pop %v1046
    %v1049 = vsinq.f32.pop %v1046
    %vm1050 = vweird.f32 %v853
    %v1051 = vand.u32 %v1047, 3
    %vm1052 = vcmp.lt.s32.totalorder %v1051, 2
    %vm1053 = vcmp.eq.s32.totalorder %v1051, 0
    %v1054 = vxor.u32 %v1049, 2147483648
    %v1055 = vsel %vm1053, %v1048, %v1054
    %vm1056 = vcmp.eq.s32.totalorder %v1051, 2
    %v1057 = vxor.u32 %v1048, 2147483648
    %v1058 = vsel %vm1056, %v1057, %v1049
    %v1059 = vsel %vm1052, %v1055, %v1058
    %v1060 = vsel %vm1050, nan, %v1059
    %v1061 = vmul.f32 %v21, 32.0
    %v1062 = vand.u32 2147483647, %v1061
    %vm1063 = vcmp.le.f32.partialorder %v1062, 0.7853982
    %vm1064 = vcmp.lt.s32.totalorder %v1061, 0
    %v1065 = vand.u32 %v1061, 2139095040
    %v1066 = vshrl.u32 %v1065, 23
    %v1067 = vsub.s32 %v1066, 127
    %v1068 = vand.u32 2147483647, %v1061
    %v1069 = vand.u32 %v1068, 8388607
    %v1070 = vor.u32 %v1069, 8388608
    %v1071 = vsub.s32 0, %v1070
    %v1072 = vadd.s32 %v1067, 1
    %vm1073 = vcmp.gt.s32.totalorder %v1072, 0
    %v1074 = vsel %vm1073, %v1072, 0
    %v1075 = vshrl.u32 %v1074, 5
    %v1076 = vand.u32 %v1074, 31
    %v1077 = vsub.s32 32, %v1076
    %v1078 = vshrl.u32 683565275, %v1077
    %v1079 = vshll.u32 683565275, %v1076
    %v1080 = vshrl.u32 2475754826, %v1077
    %v1081 = vor.u32 %v1079, %v1080
    %v1082 = vshll.u32 2475754826, %v1076
    %v1083 = vshrl.u32 2131351028, %v1077
    %v1084 = vor.u32 %v1082, %v1083
    %v1085 = vshll.u32 2131351028, %v1076
    %v1086 = vshrl.u32 2102212464, %v1077
    %v1087 = vor.u32 %v1085, %v1086
    %v1088 = vshll.u32 2102212464, %v1076
    %v1089 = vshrl.u32 920167782, %v1077
    %v1090 = vor.u32 %v1088, %v1089
    %v1091 = vshll.u32 920167782, %v1076
    %v1092 = vshrl.u32 1326507024, %v1077
    %v1093 = vor.u32 %v1091, %v1092
    %vm1094 = vcmp.lt.s32.totalorder %v1075, 1
    %vm1095 = vcmp.lt.s32.totalorder %v1075, 2
    %vm1096 = vcmp.lt.s32.totalorder %v1075, 3
    %vm1097 = vcmp.lt.s32.totalorder %v1075, 4
    %v1098 = vsel %vm1094, %v1078, %v1081
    %v1099 = vsel %vm1097, %v1087, 2102212464
    %v1100 = vsel %vm1096, %v1084, %v1099
    %v1101 = vsel %vm1095, %v1098, %v1100
    %v1102 = vsel %vm1094, %v1081, %v1084
    %v1103 = vsel %vm1097, %v1090, 920167782
    %v1104 = vsel %vm1096, %v1087, %v1103
    %v1105 = vsel %vm1095, %v1102, %v1104
    %v1106 = vsel %vm1094, %v1084, %v1087
    %v1107 = vsel %vm1097, %v1093, 1326507024
    %v1108 = vsel %vm1096, %v1090, %v1107
    %v1109 = vsel %vm1095, %v1106, %v1108
    %v1110 = vshll.u32 %v1070, 8
    %v1111 = vmul.u32.u64.compose %v1110, %v1109
    %v1112 = vextract.low.u32 %v1111
    %v1113 = vextract.high.u32 %v1111
    %v1114 = vmul.u32.u64.compose %v1110, %v1105
    %v1115 = vextract.low.u32 %v1114
    %v1116 = vextract.high.u32 %v1114
    %v1117 = vmul.u32 %v1110, %v1101
    %v1118 = vadd.s32 %v1113, %v1115
    %vm1119 = vc.u32 %v1113, %v1115
    %v1120 = vadd.s32 %v1116, 1
    %v1121 = vsel %vm1119, %v1120, %v1116
    %v1122 = vadd.s32 %v1117, %v1121
    %v1123 = vadd.s32 %v1122, 536870912
    %v1124 = vshrl.u32 %v1123, 30
    %v1125 = vshll.u32 %v1124, 30
    %v1126 = vsub.s32 %v1122, %v1125
    %vm1127 = vcmp.lt.s32.totalorder %v1126, 0
    %v1128 = vsub.s32 0, %v1126
    %v1129 = vsel %vm1127, %v1128, %v1126
    %v1130 = vclz %v1129
    %v1131 = vsub.s32 %v1130, 2
    %vm1132 = vcmp.gt.s32.totalorder 0, %v1131
    %v1133 = vsel %vm1132, 0, %v1131
    %v1134 = vsub.s32 32, %v1133
    %v1135 = vshll.u32 %v1126, %v1133
    %v1136 = vshrl.u32 %v1118, %v1134
    %v1137 = vor.u32 %v1135, %v1136
    %v1138 = vsub.s32 4294967266, %v1133
    %v1139 = vadd.s32 %v1138, 127
    %v1140 = vshll.u32 %v1139, 23
    %v1141 = vor.u32 4788187, %v1140
    %v1142 = vand.u32 2147483647, %v1141
    %v1144 = vcvt.s32.f32 %v1137
    %v1145 = vmul.f32 %v1144, %v1142
    %v1146 = vxor.u32 %v1145, 2147483648
    %v1147 = vsel %vm1064, %v1146, %v1145
    %v1148 = vsub.s32 4, %v1124
    %v1149 = vsel %vm1064, %v1148, %v1124
    %v1150 = vsel %vm1063, %v1061, %v1147
    %v1151 = vsel %vm1063, 0, %v1149
    %v1152 = vcosq.f32.pop %v1150
    %v1153 = vsinq.f32.pop %v1150
    %vm1154 = vweird.f32 %v1061
    %v1155 = vadd.s32 %v1151, 3
    %v1156 = vand.u32 %v1155, 3
    %vm1157 = vcmp.lt.s32.totalorder %v1156, 2
    %vm1158 = vcmp.eq.s32.totalorder %v1156, 0
    %v1159 = vxor.u32 %v1153, 2147483648
    %v1160 = vsel %vm1158, %v1152, %v1159
    %vm1161 = vcmp.eq.s32.totalorder %v1156, 2
    %v1162 = vxor.u32 %v1152, 2147483648
    %v1163 = vsel %vm1161, %v1162, %v1153
    %v1164 = vsel %vm1157, %v1160, %v1163
    %v1165 = vsel %vm1154, nan, %v1164
    %v1166 = vand.u32 2147483647, %v1061
    %vm1167 = vcmp.le.f32.partialorder %v1166, 0.7853982
    %vm1168 = vcmp.lt.s32.totalorder %v1061, 0
    %v1169 = vand.u32 %v1061, 2139095040
    %v1170 = vshrl.u32 %v1169, 23
    %v1171 = vsub.s32 %v1170, 127
    %v1172 = vand.u32 2147483647, %v1061
    %v1173 = vand.u32 %v1172, 8388607
    %v1174 = vor.u32 %v1173, 8388608
    %v1175 = vsub.s32 0, %v1174
    %v1176 = vadd.s32 %v1171, 1
    %vm1177 = vcmp.gt.s32.totalorder %v1176, 0
    %v1178 = vsel %vm1177, %v1176, 0
    %v1179 = vshrl.u32 %v1178, 5
    %v1180 = vand.u32 %v1178, 31
    %v1181 = vsub.s32 32, %v1180
    %v1182 = vshrl.u32 683565275, %v1181
    %v1183 = vshll.u32 683565275, %v1180
    %v1184 = vshrl.u32 2475754826, %v1181
    %v1185 = vor.u32 %v1183, %v1184
    %v1186 = vshll.u32 2475754826, %v1180
    %v1187 = vshrl.u32 2131351028, %v1181
    %v1188 = vor.u32 %v1186, %v1187
    %v1189 = vshll.u32 2131351028, %v1180
    %v1190 = vshrl.u32 2102212464, %v1181
    %v1191 = vor.u32 %v1189, %v1190
    %v1192 = vshll.u32 2102212464, %v1180
    %v1193 = vshrl.u32 920167782, %v1181
    %v1194 = vor.u32 %v1192, %v1193
    %v1195 = vshll.u32 920167782, %v1180
    %v1196 = vshrl.u32 1326507024, %v1181
    %v1197 = vor.u32 %v1195, %v1196
    %vm1198 = vcmp.lt.s32.totalorder %v1179, 1
    %vm1199 = vcmp.lt.s32.totalorder %v1179, 2
    %vm1200 = vcmp.lt.s32.totalorder %v1179, 3
    %vm1201 = vcmp.lt.s32.totalorder %v1179, 4
    %v1202 = vsel %vm1198, %v1182, %v1185
    %v1203 = vsel %vm1201, %v1191, 2102212464
    %v1204 = vsel %vm1200, %v1188, %v1203
    %v1205 = vsel %vm1199, %v1202, %v1204
    %v1206 = vsel %vm1198, %v1185, %v1188
    %v1207 = vsel %vm1201, %v1194, 920167782
    %v1208 = vsel %vm1200, %v1191, %v1207
    %v1209 = vsel %vm1199, %v1206, %v1208
    %v1210 = vsel %vm1198, %v1188, %v1191
    %v1211 = vsel %vm1201, %v1197, 1326507024
    %v1212 = vsel %vm1200, %v1194, %v1211
    %v1213 = vsel %vm1199, %v1210, %v1212
    %v1214 = vshll.u32 %v1174, 8
    %v1215 = vmul.u32.u64.compose %v1214, %v1213
    %v1216 = vextract.low.u32 %v1215
    %v1217 = vextract.high.u32 %v1215
    %v1218 = vmul.u32.u64.compose %v1214, %v1209
    %v1219 = vextract.low.u32 %v1218
    %v1220 = vextract.high.u32 %v1218
    %v1221 = vmul.u32 %v1214, %v1205
    %v1222 = vadd.s32 %v1217, %v1219
    %vm1223 = vc.u32 %v1217, %v1219
    %v1224 = vadd.s32 %v1220, 1
    %v1225 = vsel %vm1223, %v1224, %v1220
    %v1226 = vadd.s32 %v1221, %v1225
    %v1227 = vadd.s32 %v1226, 536870912
    %v1228 = vshrl.u32 %v1227, 30
    %v1229 = vshll.u32 %v1228, 30
    %v1230 = vsub.s32 %v1226, %v1229
    %vm1231 = vcmp.lt.s32.totalorder %v1230, 0
    %v1232 = vsub.s32 0, %v1230
    %v1233 = vsel %vm1231, %v1232, %v1230
    %v1234 = vclz %v1233
    %v1235 = vsub.s32 %v1234, 2
    %vm1236 = vcmp.gt.s32.totalorder 0, %v1235
    %v1237 = vsel %vm1236, 0, %v1235
    %v1238 = vsub.s32 32, %v1237
    %v1239 = vshll.u32 %v1230, %v1237
    %v1240 = vshrl.u32 %v1222, %v1238
    %v1241 = vor.u32 %v1239, %v1240
    %v1242 = vsub.s32 4294967266, %v1237
    %v1243 = vadd.s32 %v1242, 127
    %v1244 = vshll.u32 %v1243, 23
    %v1245 = vor.u32 4788187, %v1244
    %v1246 = vand.u32 2147483647, %v1245
    %v1248 = vcvt.s32.f32 %v1241
    %v1249 = vmul.f32 %v1248, %v1246
    %v1250 = vxor.u32 %v1249, 2147483648
    %v1251 = vsel %vm1168, %v1250, %v1249
    %v1252 = vsub.s32 4, %v1228
    %v1253 = vsel %vm1168, %v1252, %v1228
    %v1254 = vsel %vm1167, %v1061, %v1251
    %v1255 = vsel %vm1167, 0, %v1253
    %v1256 = vcosq.f32.pop %v1254
    %v1257 = vsinq.f32.pop %v1254
    %vm1258 = vweird.f32 %v1061
    %v1259 = vand.u32 %v1255, 3
    %vm1260 = vcmp.lt.s32.totalorder %v1259, 2
    %vm1261 = vcmp.eq.s32.totalorder %v1259, 0
    %v1262 = vxor.u32 %v1257, 2147483648
    %v1263 = vsel %vm1261, %v1256, %v1262
    %vm1264 = vcmp.eq.s32.totalorder %v1259, 2
    %v1265 = vxor.u32 %v1256, 2147483648
    %v1266 = vsel %vm1264, %v1265, %v1257
    %v1267 = vsel %vm1260, %v1263, %v1266
    %v1268 = vsel %vm1258, nan, %v1267
    %v1269 = vmul.f32 %v21, 64.0
    %v1270 = vand.u32 2147483647, %v1269
    %vm1271 = vcmp.le.f32.partialorder %v1270, 0.7853982
    %vm1272 = vcmp.lt.s32.totalorder %v1269, 0
    %v1273 = vand.u32 %v1269, 2139095040
    %v1274 = vshrl.u32 %v1273, 23
    %v1275 = vsub.s32 %v1274, 127
    %v1276 = vand.u32 2147483647, %v1269
    %v1277 = vand.u32 %v1276, 8388607
    %v1278 = vor.u32 %v1277, 8388608
    %v1279 = vsub.s32 0, %v1278
    %v1280 = vadd.s32 %v1275, 1
    %vm1281 = vcmp.gt.s32.totalorder %v1280, 0
    %v1282 = vsel %vm1281, %v1280, 0
    %v1283 = vshrl.u32 %v1282, 5
    %v1284 = vand.u32 %v1282, 31
    %v1285 = vsub.s32 32, %v1284
    %v1286 = vshrl.u32 683565275, %v1285
    %v1287 = vshll.u32 683565275, %v1284
    %v1288 = vshrl.u32 2475754826, %v1285
    %v1289 = vor.u32 %v1287, %v1288
    %v1290 = vshll.u32 2475754826, %v1284
    %v1291 = vshrl.u32 2131351028, %v1285
    %v1292 = vor.u32 %v1290, %v1291
    %v1293 = vshll.u32 2131351028, %v1284
    %v1294 = vshrl.u32 2102212464, %v1285
    %v1295 = vor.u32 %v1293, %v1294
    %v1296 = vshll.u32 2102212464, %v1284
    %v1297 = vshrl.u32 920167782, %v1285
    %v1298 = vor.u32 %v1296, %v1297
    %v1299 = vshll.u32 920167782, %v1284
    %v1300 = vshrl.u32 1326507024, %v1285
    %v1301 = vor.u32 %v1299, %v1300
    %vm1302 = vcmp.lt.s32.totalorder %v1283, 1
    %vm1303 = vcmp.lt.s32.totalorder %v1283, 2
    %vm1304 = vcmp.lt.s32.totalorder %v1283, 3
    %vm1305 = vcmp.lt.s32.totalorder %v1283, 4
    %v1306 = vsel %vm1302, %v1286, %v1289
    %v1307 = vsel %vm1305, %v1295, 2102212464
    %v1308 = vsel %vm1304, %v1292, %v1307
    %v1309 = vsel %vm1303, %v1306, %v1308
    %v1310 = vsel %vm1302, %v1289, %v1292
    %v1311 = vsel %vm1305, %v1298, 920167782
    %v1312 = vsel %vm1304, %v1295, %v1311
    %v1313 = vsel %vm1303, %v1310, %v1312
    %v1314 = vsel %vm1302, %v1292, %v1295
    %v1315 = vsel %vm1305, %v1301, 1326507024
    %v1316 = vsel %vm1304, %v1298, %v1315
    %v1317 = vsel %vm1303, %v1314, %v1316
    %v1318 = vshll.u32 %v1278, 8
    %v1319 = vmul.u32.u64.compose %v1318, %v1317
    %v1320 = vextract.low.u32 %v1319
    %v1321 = vextract.high.u32 %v1319
    %v1322 = vmul.u32.u64.compose %v1318, %v1313
    %v1323 = vextract.low.u32 %v1322
    %v1324 = vextract.high.u32 %v1322
    %v1325 = vmul.u32 %v1318, %v1309
    %v1326 = vadd.s32 %v1321, %v1323
    %vm1327 = vc.u32 %v1321, %v1323
    %v1328 = vadd.s32 %v1324, 1
    %v1329 = vsel %vm1327, %v1328, %v1324
    %v1330 = vadd.s32 %v1325, %v1329
    %v1331 = vadd.s32 %v1330, 536870912
    %v1332 = vshrl.u32 %v1331, 30
    %v1333 = vshll.u32 %v1332, 30
    %v1334 = vsub.s32 %v1330, %v1333
    %vm1335 = vcmp.lt.s32.totalorder %v1334, 0
    %v1336 = vsub.s32 0, %v1334
    %v1337 = vsel %vm1335, %v1336, %v1334
    %v1338 = vclz %v1337
    %v1339 = vsub.s32 %v1338, 2
    %vm1340 = vcmp.gt.s32.totalorder 0, %v1339
    %v1341 = vsel %vm1340, 0, %v1339
    %v1342 = vsub.s32 32, %v1341
    %v1343 = vshll.u32 %v1334, %v1341
    %v1344 = vshrl.u32 %v1326, %v1342
    %v1345 = vor.u32 %v1343, %v1344
    %v1346 = vsub.s32 4294967266, %v1341
    %v1347 = vadd.s32 %v1346, 127
    %v1348 = vshll.u32 %v1347, 23
    %v1349 = vor.u32 4788187, %v1348
    %v1350 = vand.u32 2147483647, %v1349
    %v1352 = vcvt.s32.f32 %v1345
    %v1353 = vmul.f32 %v1352, %v1350
    %v1354 = vxor.u32 %v1353, 2147483648
    %v1355 = vsel %vm1272, %v1354, %v1353
    %v1356 = vsub.s32 4, %v1332
    %v1357 = vsel %vm1272, %v1356, %v1332
    %v1358 = vsel %vm1271, %v1269, %v1355
    %v1359 = vsel %vm1271, 0, %v1357
    %v1360 = vcosq.f32.pop %v1358
    %v1361 = vsinq.f32.pop %v1358
    %vm1362 = vweird.f32 %v1269
    %v1363 = vadd.s32 %v1359, 3
    %v1364 = vand.u32 %v1363, 3
    %vm1365 = vcmp.lt.s32.totalorder %v1364, 2
    %vm1366 = vcmp.eq.s32.totalorder %v1364, 0
    %v1367 = vxor.u32 %v1361, 2147483648
    %v1368 = vsel %vm1366, %v1360, %v1367
    %vm1369 = vcmp.eq.s32.totalorder %v1364, 2
    %v1370 = vxor.u32 %v1360, 2147483648
    %v1371 = vsel %vm1369, %v1370, %v1361
    %v1372 = vsel %vm1365, %v1368, %v1371
    %v1373 = vsel %vm1362, nan, %v1372
    %v1374 = vand.u32 2147483647, %v1269
    %vm1375 = vcmp.le.f32.partialorder %v1374, 0.7853982
    %vm1376 = vcmp.lt.s32.totalorder %v1269, 0
    %v1377 = vand.u32 %v1269, 2139095040
    %v1378 = vshrl.u32 %v1377, 23
    %v1379 = vsub.s32 %v1378, 127
    %v1380 = vand.u32 2147483647, %v1269
    %v1381 = vand.u32 %v1380, 8388607
    %v1382 = vor.u32 %v1381, 8388608
    %v1383 = vsub.s32 0, %v1382
    %v1384 = vadd.s32 %v1379, 1
    %vm1385 = vcmp.gt.s32.totalorder %v1384, 0
    %v1386 = vsel %vm1385, %v1384, 0
    %v1387 = vshrl.u32 %v1386, 5
    %v1388 = vand.u32 %v1386, 31
    %v1389 = vsub.s32 32, %v1388
    %v1390 = vshrl.u32 683565275, %v1389
    %v1391 = vshll.u32 683565275, %v1388
    %v1392 = vshrl.u32 2475754826, %v1389
    %v1393 = vor.u32 %v1391, %v1392
    %v1394 = vshll.u32 2475754826, %v1388
    %v1395 = vshrl.u32 2131351028, %v1389
    %v1396 = vor.u32 %v1394, %v1395
    %v1397 = vshll.u32 2131351028, %v1388
    %v1398 = vshrl.u32 2102212464, %v1389
    %v1399 = vor.u32 %v1397, %v1398
    %v1400 = vshll.u32 2102212464, %v1388
    %v1401 = vshrl.u32 920167782, %v1389
    %v1402 = vor.u32 %v1400, %v1401
    %v1403 = vshll.u32 920167782, %v1388
    %v1404 = vshrl.u32 1326507024, %v1389
    %v1405 = vor.u32 %v1403, %v1404
    %vm1406 = vcmp.lt.s32.totalorder %v1387, 1
    %vm1407 = vcmp.lt.s32.totalorder %v1387, 2
    %vm1408 = vcmp.lt.s32.totalorder %v1387, 3
    %vm1409 = vcmp.lt.s32.totalorder %v1387, 4
    %v1410 = vsel %vm1406, %v1390, %v1393
    %v1411 = vsel %vm1409, %v1399, 2102212464
    %v1412 = vsel %vm1408, %v1396, %v1411
    %v1413 = vsel %vm1407, %v1410, %v1412
    %v1414 = vsel %vm1406, %v1393, %v1396
    %v1415 = vsel %vm1409, %v1402, 920167782
    %v1416 = vsel %vm1408, %v1399, %v1415
    %v1417 = vsel %vm1407, %v1414, %v1416
    %v1418 = vsel %vm1406, %v1396, %v1399
    %v1419 = vsel %vm1409, %v1405, 1326507024
    %v1420 = vsel %vm1408, %v1402, %v1419
    %v1421 = vsel %vm1407, %v1418, %v1420
    %v1422 = vshll.u32 %v1382, 8
    %v1423 = vmul.u32.u64.compose %v1422, %v1421
    %v1424 = vextract.low.u32 %v1423
    %v1425 = vextract.high.u32 %v1423
    %v1426 = vmul.u32.u64.compose %v1422, %v1417
    %v1427 = vextract.low.u32 %v1426
    %v1428 = vextract.high.u32 %v1426
    %v1429 = vmul.u32 %v1422, %v1413
    %v1430 = vadd.s32 %v1425, %v1427
    %vm1431 = vc.u32 %v1425, %v1427
    %v1432 = vadd.s32 %v1428, 1
    %v1433 = vsel %vm1431, %v1432, %v1428
    %v1434 = vadd.s32 %v1429, %v1433
    %v1435 = vadd.s32 %v1434, 536870912
    %v1436 = vshrl.u32 %v1435, 30
    %v1437 = vshll.u32 %v1436, 30
    %v1438 = vsub.s32 %v1434, %v1437
    %vm1439 = vcmp.lt.s32.totalorder %v1438, 0
    %v1440 = vsub.s32 0, %v1438
    %v1441 = vsel %vm1439, %v1440, %v1438
    %v1442 = vclz %v1441
    %v1443 = vsub.s32 %v1442, 2
    %vm1444 = vcmp.gt.s32.totalorder 0, %v1443
    %v1445 = vsel %vm1444, 0, %v1443
    %v1446 = vsub.s32 32, %v1445
    %v1447 = vshll.u32 %v1438, %v1445
    %v1448 = vshrl.u32 %v1430, %v1446
    %v1449 = vor.u32 %v1447, %v1448
    %v1450 = vsub.s32 4294967266, %v1445
    %v1451 = vadd.s32 %v1450, 127
    %v1452 = vshll.u32 %v1451, 23
    %v1453 = vor.u32 4788187, %v1452
    %v1454 = vand.u32 2147483647, %v1453
    %v1456 = vcvt.s32.f32 %v1449
    %v1457 = vmul.f32 %v1456, %v1454
    %v1458 = vxor.u32 %v1457, 2147483648
    %v1459 = vsel %vm1376, %v1458, %v1457
    %v1460 = vsub.s32 4, %v1436
    %v1461 = vsel %vm1376, %v1460, %v1436
    %v1462 = vsel %vm1375, %v1269, %v1459
    %v1463 = vsel %vm1375, 0, %v1461
    %v1464 = vcosq.f32.pop %v1462
    %v1465 = vsinq.f32.pop %v1462
    %vm1466 = vweird.f32 %v1269
    %v1467 = vand.u32 %v1463, 3
    %vm1468 = vcmp.lt.s32.totalorder %v1467, 2
    %vm1469 = vcmp.eq.s32.totalorder %v1467, 0
    %v1470 = vxor.u32 %v1465, 2147483648
    %v1471 = vsel %vm1469, %v1464, %v1470
    %vm1472 = vcmp.eq.s32.totalorder %v1467, 2
    %v1473 = vxor.u32 %v1464, 2147483648
    %v1474 = vsel %vm1472, %v1473, %v1465
    %v1475 = vsel %vm1468, %v1471, %v1474
    %v1476 = vsel %vm1466, nan, %v1475
    %v1477 = vmul.f32 %v21, 128.0
    %v1478 = vand.u32 2147483647, %v1477
    %vm1479 = vcmp.le.f32.partialorder %v1478, 0.7853982
    %vm1480 = vcmp.lt.s32.totalorder %v1477, 0
    %v1481 = vand.u32 %v1477, 2139095040
    %v1482 = vshrl.u32 %v1481, 23
    %v1483 = vsub.s32 %v1482, 127
    %v1484 = vand.u32 2147483647, %v1477
    %v1485 = vand.u32 %v1484, 8388607
    %v1486 = vor.u32 %v1485, 8388608
    %v1487 = vsub.s32 0, %v1486
    %v1488 = vadd.s32 %v1483, 1
    %vm1489 = vcmp.gt.s32.totalorder %v1488, 0
    %v1490 = vsel %vm1489, %v1488, 0
    %v1491 = vshrl.u32 %v1490, 5
    %v1492 = vand.u32 %v1490, 31
    %v1493 = vsub.s32 32, %v1492
    %v1494 = vshrl.u32 683565275, %v1493
    %v1495 = vshll.u32 683565275, %v1492
    %v1496 = vshrl.u32 2475754826, %v1493
    %v1497 = vor.u32 %v1495, %v1496
    %v1498 = vshll.u32 2475754826, %v1492
    %v1499 = vshrl.u32 2131351028, %v1493
    %v1500 = vor.u32 %v1498, %v1499
    %v1501 = vshll.u32 2131351028, %v1492
    %v1502 = vshrl.u32 2102212464, %v1493
    %v1503 = vor.u32 %v1501, %v1502
    %v1504 = vshll.u32 2102212464, %v1492
    %v1505 = vshrl.u32 920167782, %v1493
    %v1506 = vor.u32 %v1504, %v1505
    %v1507 = vshll.u32 920167782, %v1492
    %v1508 = vshrl.u32 1326507024, %v1493
    %v1509 = vor.u32 %v1507, %v1508
    %vm1510 = vcmp.lt.s32.totalorder %v1491, 1
    %vm1511 = vcmp.lt.s32.totalorder %v1491, 2
    %vm1512 = vcmp.lt.s32.totalorder %v1491, 3
    %vm1513 = vcmp.lt.s32.totalorder %v1491, 4
    %v1514 = vsel %vm1510, %v1494, %v1497
    %v1515 = vsel %vm1513, %v1503, 2102212464
    %v1516 = vsel %vm1512, %v1500, %v1515
    %v1517 = vsel %vm1511, %v1514, %v1516
    %v1518 = vsel %vm1510, %v1497, %v1500
    %v1519 = vsel %vm1513, %v1506, 920167782
    %v1520 = vsel %vm1512, %v1503, %v1519
    %v1521 = vsel %vm1511, %v1518, %v1520
    %v1522 = vsel %vm1510, %v1500, %v1503
    %v1523 = vsel %vm1513, %v1509, 1326507024
    %v1524 = vsel %vm1512, %v1506, %v1523
    %v1525 = vsel %vm1511, %v1522, %v1524
    %v1526 = vshll.u32 %v1486, 8
    %v1527 = vmul.u32.u64.compose %v1526, %v1525
    %v1528 = vextract.low.u32 %v1527
    %v1529 = vextract.high.u32 %v1527
    %v1530 = vmul.u32.u64.compose %v1526, %v1521
    %v1531 = vextract.low.u32 %v1530
    %v1532 = vextract.high.u32 %v1530
    %v1533 = vmul.u32 %v1526, %v1517
    %v1534 = vadd.s32 %v1529, %v1531
    %vm1535 = vc.u32 %v1529, %v1531
    %v1536 = vadd.s32 %v1532, 1
    %v1537 = vsel %vm1535, %v1536, %v1532
    %v1538 = vadd.s32 %v1533, %v1537
    %v1539 = vadd.s32 %v1538, 536870912
    %v1540 = vshrl.u32 %v1539, 30
    %v1541 = vshll.u32 %v1540, 30
    %v1542 = vsub.s32 %v1538, %v1541
    %vm1543 = vcmp.lt.s32.totalorder %v1542, 0
    %v1544 = vsub.s32 0, %v1542
    %v1545 = vsel %vm1543, %v1544, %v1542
    %v1546 = vclz %v1545
    %v1547 = vsub.s32 %v1546, 2
    %vm1548 = vcmp.gt.s32.totalorder 0, %v1547
    %v1549 = vsel %vm1548, 0, %v1547
    %v1550 = vsub.s32 32, %v1549
    %v1551 = vshll.u32 %v1542, %v1549
    %v1552 = vshrl.u32 %v1534, %v1550
    %v1553 = vor.u32 %v1551, %v1552
    %v1554 = vsub.s32 4294967266, %v1549
    %v1555 = vadd.s32 %v1554, 127
    %v1556 = vshll.u32 %v1555, 23
    %v1557 = vor.u32 4788187, %v1556
    %v1558 = vand.u32 2147483647, %v1557
    %v1560 = vcvt.s32.f32 %v1553
    %v1561 = vmul.f32 %v1560, %v1558
    %v1562 = vxor.u32 %v1561, 2147483648
    %v1563 = vsel %vm1480, %v1562, %v1561
    %v1564 = vsub.s32 4, %v1540
    %v1565 = vsel %vm1480, %v1564, %v1540
    %v1566 = vsel %vm1479, %v1477, %v1563
    %v1567 = vsel %vm1479, 0, %v1565
    %v1568 = vcosq.f32.pop %v1566
    %v1569 = vsinq.f32.pop %v1566
    %vm1570 = vweird.f32 %v1477
    %v1571 = vadd.s32 %v1567, 3
    %v1572 = vand.u32 %v1571, 3
    %vm1573 = vcmp.lt.s32.totalorder %v1572, 2
    %vm1574 = vcmp.eq.s32.totalorder %v1572, 0
    %v1575 = vxor.u32 %v1569, 2147483648
    %v1576 = vsel %vm1574, %v1568, %v1575
    %vm1577 = vcmp.eq.s32.totalorder %v1572, 2
    %v1578 = vxor.u32 %v1568, 2147483648
    %v1579 = vsel %vm1577, %v1578, %v1569
    %v1580 = vsel %vm1573, %v1576, %v1579
    %v1581 = vsel %vm1570, nan, %v1580
    %v1582 = vand.u32 2147483647, %v1477
    %vm1583 = vcmp.le.f32.partialorder %v1582, 0.7853982
    %vm1584 = vcmp.lt.s32.totalorder %v1477, 0
    %v1585 = vand.u32 %v1477, 2139095040
    %v1586 = vshrl.u32 %v1585, 23
    %v1587 = vsub.s32 %v1586, 127
    %v1588 = vand.u32 2147483647, %v1477
    %v1589 = vand.u32 %v1588, 8388607
    %v1590 = vor.u32 %v1589, 8388608
    %v1591 = vsub.s32 0, %v1590
    %v1592 = vadd.s32 %v1587, 1
    %vm1593 = vcmp.gt.s32.totalorder %v1592, 0
    %v1594 = vsel %vm1593, %v1592, 0
    %v1595 = vshrl.u32 %v1594, 5
    %v1596 = vand.u32 %v1594, 31
    %v1597 = vsub.s32 32, %v1596
    %v1598 = vshrl.u32 683565275, %v1597
    %v1599 = vshll.u32 683565275, %v1596
    %v1600 = vshrl.u32 2475754826, %v1597
    %v1601 = vor.u32 %v1599, %v1600
    %v1602 = vshll.u32 2475754826, %v1596
    %v1603 = vshrl.u32 2131351028, %v1597
    %v1604 = vor.u32 %v1602, %v1603
    %v1605 = vshll.u32 2131351028, %v1596
    %v1606 = vshrl.u32 2102212464, %v1597
    %v1607 = vor.u32 %v1605, %v1606
    %v1608 = vshll.u32 2102212464, %v1596
    %v1609 = vshrl.u32 920167782, %v1597
    %v1610 = vor.u32 %v1608, %v1609
    %v1611 = vshll.u32 920167782, %v1596
    %v1612 = vshrl.u32 1326507024, %v1597
    %v1613 = vor.u32 %v1611, %v1612
    %vm1614 = vcmp.lt.s32.totalorder %v1595, 1
    %vm1615 = vcmp.lt.s32.totalorder %v1595, 2
    %vm1616 = vcmp.lt.s32.totalorder %v1595, 3
    %vm1617 = vcmp.lt.s32.totalorder %v1595, 4
    %v1618 = vsel %vm1614, %v1598, %v1601
    %v1619 = vsel %vm1617, %v1607, 2102212464
    %v1620 = vsel %vm1616, %v1604, %v1619
    %v1621 = vsel %vm1615, %v1618, %v1620
    %v1622 = vsel %vm1614, %v1601, %v1604
    %v1623 = vsel %vm1617, %v1610, 920167782
    %v1624 = vsel %vm1616, %v1607, %v1623
    %v1625 = vsel %vm1615, %v1622, %v1624
    %v1626 = vsel %vm1614, %v1604, %v1607
    %v1627 = vsel %vm1617, %v1613, 1326507024
    %v1628 = vsel %vm1616, %v1610, %v1627
    %v1629 = vsel %vm1615, %v1626, %v1628
    %v1630 = vshll.u32 %v1590, 8
    %v1631 = vmul.u32.u64.compose %v1630, %v1629
    %v1632 = vextract.low.u32 %v1631
    %v1633 = vextract.high.u32 %v1631
    %v1634 = vmul.u32.u64.compose %v1630, %v1625
    %v1635 = vextract.low.u32 %v1634
    %v1636 = vextract.high.u32 %v1634
    %v1637 = vmul.u32 %v1630, %v1621
    %v1638 = vadd.s32 %v1633, %v1635
    %vm1639 = vc.u32 %v1633, %v1635
    %v1640 = vadd.s32 %v1636, 1
    %v1641 = vsel %vm1639, %v1640, %v1636
    %v1642 = vadd.s32 %v1637, %v1641
    %v1643 = vadd.s32 %v1642, 536870912
    %v1644 = vshrl.u32 %v1643, 30
    %v1645 = vshll.u32 %v1644, 30
    %v1646 = vsub.s32 %v1642, %v1645
    %vm1647 = vcmp.lt.s32.totalorder %v1646, 0
    %v1648 = vsub.s32 0, %v1646
    %v1649 = vsel %vm1647, %v1648, %v1646
    %v1650 = vclz %v1649
    %v1651 = vsub.s32 %v1650, 2
    %vm1652 = vcmp.gt.s32.totalorder 0, %v1651
    %v1653 = vsel %vm1652, 0, %v1651
    %v1654 = vsub.s32 32, %v1653
    %v1655 = vshll.u32 %v1646, %v1653
    %v1656 = vshrl.u32 %v1638, %v1654
    %v1657 = vor.u32 %v1655, %v1656
    %v1658 = vsub.s32 4294967266, %v1653
    %v1659 = vadd.s32 %v1658, 127
    %v1660 = vshll.u32 %v1659, 23
    %v1661 = vor.u32 4788187, %v1660
    %v1662 = vand.u32 2147483647, %v1661
    %v1664 = vcvt.s32.f32 %v1657
    %v1665 = vmul.f32 %v1664, %v1662
    %v1666 = vxor.u32 %v1665, 2147483648
    %v1667 = vsel %vm1584, %v1666, %v1665
    %v1668 = vsub.s32 4, %v1644
    %v1669 = vsel %vm1584, %v1668, %v1644
    %v1670 = vsel %vm1583, %v1477, %v1667
    %v1671 = vsel %vm1583, 0, %v1669
    %v1672 = vcosq.f32.pop %v1670
    %v1673 = vsinq.f32.pop %v1670
    %vm1674 = vweird.f32 %v1477
    %v1675 = vand.u32 %v1671, 3
    %vm1676 = vcmp.lt.s32.totalorder %v1675, 2
    %vm1677 = vcmp.eq.s32.totalorder %v1675, 0
    %v1678 = vxor.u32 %v1673, 2147483648
    %v1679 = vsel %vm1677, %v1672, %v1678
    %vm1680 = vcmp.eq.s32.totalorder %v1675, 2
    %v1681 = vxor.u32 %v1672, 2147483648
    %v1682 = vsel %vm1680, %v1681, %v1673
    %v1683 = vsel %vm1676, %v1679, %v1682
    %v1684 = vsel %vm1674, nan, %v1683
    %v1685 = vmul.f32 %v21, 256.0
    %v1686 = vand.u32 2147483647, %v1685
    %vm1687 = vcmp.le.f32.partialorder %v1686, 0.7853982
    %vm1688 = vcmp.lt.s32.totalorder %v1685, 0
    %v1689 = vand.u32 %v1685, 2139095040
    %v1690 = vshrl.u32 %v1689, 23
    %v1691 = vsub.s32 %v1690, 127
    %v1692 = vand.u32 2147483647, %v1685
    %v1693 = vand.u32 %v1692, 8388607
    %v1694 = vor.u32 %v1693, 8388608
    %v1695 = vsub.s32 0, %v1694
    %v1696 = vadd.s32 %v1691, 1
    %vm1697 = vcmp.gt.s32.totalorder %v1696, 0
    %v1698 = vsel %vm1697, %v1696, 0
    %v1699 = vshrl.u32 %v1698, 5
    %v1700 = vand.u32 %v1698, 31
    %v1701 = vsub.s32 32, %v1700
    %v1702 = vshrl.u32 683565275, %v1701
    %v1703 = vshll.u32 683565275, %v1700
    %v1704 = vshrl.u32 2475754826, %v1701
    %v1705 = vor.u32 %v1703, %v1704
    %v1706 = vshll.u32 2475754826, %v1700
    %v1707 = vshrl.u32 2131351028, %v1701
    %v1708 = vor.u32 %v1706, %v1707
    %v1709 = vshll.u32 2131351028, %v1700
    %v1710 = vshrl.u32 2102212464, %v1701
    %v1711 = vor.u32 %v1709, %v1710
    %v1712 = vshll.u32 2102212464, %v1700
    %v1713 = vshrl.u32 920167782, %v1701
    %v1714 = vor.u32 %v1712, %v1713
    %v1715 = vshll.u32 920167782, %v1700
    %v1716 = vshrl.u32 1326507024, %v1701
    %v1717 = vor.u32 %v1715, %v1716
    %vm1718 = vcmp.lt.s32.totalorder %v1699, 1
    %vm1719 = vcmp.lt.s32.totalorder %v1699, 2
    %vm1720 = vcmp.lt.s32.totalorder %v1699, 3
    %vm1721 = vcmp.lt.s32.totalorder %v1699, 4
    %v1722 = vsel %vm1718, %v1702, %v1705
    %v1723 = vsel %vm1721, %v1711, 2102212464
    %v1724 = vsel %vm1720, %v1708, %v1723
    %v1725 = vsel %vm1719, %v1722, %v1724
    %v1726 = vsel %vm1718, %v1705, %v1708
    %v1727 = vsel %vm1721, %v1714, 920167782
    %v1728 = vsel %vm1720, %v1711, %v1727
    %v1729 = vsel %vm1719, %v1726, %v1728
    %v1730 = vsel %vm1718, %v1708, %v1711
    %v1731 = vsel %vm1721, %v1717, 1326507024
    %v1732 = vsel %vm1720, %v1714, %v1731
    %v1733 = vsel %vm1719, %v1730, %v1732
    %v1734 = vshll.u32 %v1694, 8
    %v1735 = vmul.u32.u64.compose %v1734, %v1733
    %v1736 = vextract.low.u32 %v1735
    %v1737 = vextract.high.u32 %v1735
    %v1738 = vmul.u32.u64.compose %v1734, %v1729
    %v1739 = vextract.low.u32 %v1738
    %v1740 = vextract.high.u32 %v1738
    %v1741 = vmul.u32 %v1734, %v1725
    %v1742 = vadd.s32 %v1737, %v1739
    %vm1743 = vc.u32 %v1737, %v1739
    %v1744 = vadd.s32 %v1740, 1
    %v1745 = vsel %vm1743, %v1744, %v1740
    %v1746 = vadd.s32 %v1741, %v1745
    %v1747 = vadd.s32 %v1746, 536870912
    %v1748 = vshrl.u32 %v1747, 30
    %v1749 = vshll.u32 %v1748, 30
    %v1750 = vsub.s32 %v1746, %v1749
    %vm1751 = vcmp.lt.s32.totalorder %v1750, 0
    %v1752 = vsub.s32 0, %v1750
    %v1753 = vsel %vm1751, %v1752, %v1750
    %v1754 = vclz %v1753
    %v1755 = vsub.s32 %v1754, 2
    %vm1756 = vcmp.gt.s32.totalorder 0, %v1755
    %v1757 = vsel %vm1756, 0, %v1755
    %v1758 = vsub.s32 32, %v1757
    %v1759 = vshll.u32 %v1750, %v1757
    %v1760 = vshrl.u32 %v1742, %v1758
    %v1761 = vor.u32 %v1759, %v1760
    %v1762 = vsub.s32 4294967266, %v1757
    %v1763 = vadd.s32 %v1762, 127
    %v1764 = vshll.u32 %v1763, 23
    %v1765 = vor.u32 4788187, %v1764
    %v1766 = vand.u32 2147483647, %v1765
    %v1768 = vcvt.s32.f32 %v1761
    %v1769 = vmul.f32 %v1768, %v1766
    %v1770 = vxor.u32 %v1769, 2147483648
    %v1771 = vsel %vm1688, %v1770, %v1769
    %v1772 = vsub.s32 4, %v1748
    %v1773 = vsel %vm1688, %v1772, %v1748
    %v1774 = vsel %vm1687, %v1685, %v1771
    %v1775 = vsel %vm1687, 0, %v1773
    %v1776 = vcosq.f32.pop %v1774
    %v1777 = vsinq.f32.pop %v1774
    %vm1778 = vweird.f32 %v1685
    %v1779 = vadd.s32 %v1775, 3
    %v1780 = vand.u32 %v1779, 3
    %vm1781 = vcmp.lt.s32.totalorder %v1780, 2
    %vm1782 = vcmp.eq.s32.totalorder %v1780, 0
    %v1783 = vxor.u32 %v1777, 2147483648
    %v1784 = vsel %vm1782, %v1776, %v1783
    %vm1785 = vcmp.eq.s32.totalorder %v1780, 2
    %v1786 = vxor.u32 %v1776, 2147483648
    %v1787 = vsel %vm1785, %v1786, %v1777
    %v1788 = vsel %vm1781, %v1784, %v1787
    %v1789 = vsel %vm1778, nan, %v1788
    %v1790 = vand.u32 2147483647, %v1685
    %vm1791 = vcmp.le.f32.partialorder %v1790, 0.7853982
    %vm1792 = vcmp.lt.s32.totalorder %v1685, 0
    %v1793 = vand.u32 %v1685, 2139095040
    %v1794 = vshrl.u32 %v1793, 23
    %v1795 = vsub.s32 %v1794, 127
    %v1796 = vand.u32 2147483647, %v1685
    %v1797 = vand.u32 %v1796, 8388607
    %v1798 = vor.u32 %v1797, 8388608
    %v1799 = vsub.s32 0, %v1798
    %v1800 = vadd.s32 %v1795, 1
    %vm1801 = vcmp.gt.s32.totalorder %v1800, 0
    %v1802 = vsel %vm1801, %v1800, 0
    %v1803 = vshrl.u32 %v1802, 5
    %v1804 = vand.u32 %v1802, 31
    %v1805 = vsub.s32 32, %v1804
    %v1806 = vshrl.u32 683565275, %v1805
    %v1807 = vshll.u32 683565275, %v1804
    %v1808 = vshrl.u32 2475754826, %v1805
    %v1809 = vor.u32 %v1807, %v1808
    %v1810 = vshll.u32 2475754826, %v1804
    %v1811 = vshrl.u32 2131351028, %v1805
    %v1812 = vor.u32 %v1810, %v1811
    %v1813 = vshll.u32 2131351028, %v1804
    %v1814 = vshrl.u32 2102212464, %v1805
    %v1815 = vor.u32 %v1813, %v1814
    %v1816 = vshll.u32 2102212464, %v1804
    %v1817 = vshrl.u32 920167782, %v1805
    %v1818 = vor.u32 %v1816, %v1817
    %v1819 = vshll.u32 920167782, %v1804
    %v1820 = vshrl.u32 1326507024, %v1805
    %v1821 = vor.u32 %v1819, %v1820
    %vm1822 = vcmp.lt.s32.totalorder %v1803, 1
    %vm1823 = vcmp.lt.s32.totalorder %v1803, 2
    %vm1824 = vcmp.lt.s32.totalorder %v1803, 3
    %vm1825 = vcmp.lt.s32.totalorder %v1803, 4
    %v1826 = vsel %vm1822, %v1806, %v1809
    %v1827 = vsel %vm1825, %v1815, 2102212464
    %v1828 = vsel %vm1824, %v1812, %v1827
    %v1829 = vsel %vm1823, %v1826, %v1828
    %v1830 = vsel %vm1822, %v1809, %v1812
    %v1831 = vsel %vm1825, %v1818, 920167782
    %v1832 = vsel %vm1824, %v1815, %v1831
    %v1833 = vsel %vm1823, %v1830, %v1832
    %v1834 = vsel %vm1822, %v1812, %v1815
    %v1835 = vsel %vm1825, %v1821, 1326507024
    %v1836 = vsel %vm1824, %v1818, %v1835
    %v1837 = vsel %vm1823, %v1834, %v1836
    %v1838 = vshll.u32 %v1798, 8
    %v1839 = vmul.u32.u64.compose %v1838, %v1837
    %v1840 = vextract.low.u32 %v1839
    %v1841 = vextract.high.u32 %v1839
    %v1842 = vmul.u32.u64.compose %v1838, %v1833
    %v1843 = vextract.low.u32 %v1842
    %v1844 = vextract.high.u32 %v1842
    %v1845 = vmul.u32 %v1838, %v1829
    %v1846 = vadd.s32 %v1841, %v1843
    %vm1847 = vc.u32 %v1841, %v1843
    %v1848 = vadd.s32 %v1844, 1
    %v1849 = vsel %vm1847, %v1848, %v1844
    %v1850 = vadd.s32 %v1845, %v1849
    %v1851 = vadd.s32 %v1850, 536870912
    %v1852 = vshrl.u32 %v1851, 30
    %v1853 = vshll.u32 %v1852, 30
    %v1854 = vsub.s32 %v1850, %v1853
    %vm1855 = vcmp.lt.s32.totalorder %v1854, 0
    %v1856 = vsub.s32 0, %v1854
    %v1857 = vsel %vm1855, %v1856, %v1854
    %v1858 = vclz %v1857
    %v1859 = vsub.s32 %v1858, 2
    %vm1860 = vcmp.gt.s32.totalorder 0, %v1859
    %v1861 = vsel %vm1860, 0, %v1859
    %v1862 = vsub.s32 32, %v1861
    %v1863 = vshll.u32 %v1854, %v1861
    %v1864 = vshrl.u32 %v1846, %v1862
    %v1865 = vor.u32 %v1863, %v1864
    %v1866 = vsub.s32 4294967266, %v1861
    %v1867 = vadd.s32 %v1866, 127
    %v1868 = vshll.u32 %v1867, 23
    %v1869 = vor.u32 4788187, %v1868
    %v1870 = vand.u32 2147483647, %v1869
    %v1872 = vcvt.s32.f32 %v1865
    %v1873 = vmul.f32 %v1872, %v1870
    %v1874 = vxor.u32 %v1873, 2147483648
    %v1875 = vsel %vm1792, %v1874, %v1873
    %v1876 = vsub.s32 4, %v1852
    %v1877 = vsel %vm1792, %v1876, %v1852
    %v1878 = vsel %vm1791, %v1685, %v1875
    %v1879 = vsel %vm1791, 0, %v1877
    %v1880 = vcosq.f32.pop %v1878
    %v1881 = vsinq.f32.pop %v1878
    %vm1882 = vweird.f32 %v1685
    %v1883 = vand.u32 %v1879, 3
    %vm1884 = vcmp.lt.s32.totalorder %v1883, 2
    %vm1885 = vcmp.eq.s32.totalorder %v1883, 0
    %v1886 = vxor.u32 %v1881, 2147483648
    %v1887 = vsel %vm1885, %v1880, %v1886
    %vm1888 = vcmp.eq.s32.totalorder %v1883, 2
    %v1889 = vxor.u32 %v1880, 2147483648
    %v1890 = vsel %vm1888, %v1889, %v1881
    %v1891 = vsel %vm1884, %v1887, %v1890
    %v1892 = vsel %vm1882, nan, %v1891
    %v1893 = vmul.f32 %v21, 512.0
    %v1894 = vand.u32 2147483647, %v1893
    %vm1895 = vcmp.le.f32.partialorder %v1894, 0.7853982
    %vm1896 = vcmp.lt.s32.totalorder %v1893, 0
    %v1897 = vand.u32 %v1893, 2139095040
    %v1898 = vshrl.u32 %v1897, 23
    %v1899 = vsub.s32 %v1898, 127
    %v1900 = vand.u32 2147483647, %v1893
    %v1901 = vand.u32 %v1900, 8388607
    %v1902 = vor.u32 %v1901, 8388608
    %v1903 = vsub.s32 0, %v1902
    %v1904 = vadd.s32 %v1899, 1
    %vm1905 = vcmp.gt.s32.totalorder %v1904, 0
    %v1906 = vsel %vm1905, %v1904, 0
    %v1907 = vshrl.u32 %v1906, 5
    %v1908 = vand.u32 %v1906, 31
    %v1909 = vsub.s32 32, %v1908
    %v1910 = vshrl.u32 683565275, %v1909
    %v1911 = vshll.u32 683565275, %v1908
    %v1912 = vshrl.u32 2475754826, %v1909
    %v1913 = vor.u32 %v1911, %v1912
    %v1914 = vshll.u32 2475754826, %v1908
    %v1915 = vshrl.u32 2131351028, %v1909
    %v1916 = vor.u32 %v1914, %v1915
    %v1917 = vshll.u32 2131351028, %v1908
    %v1918 = vshrl.u32 2102212464, %v1909
    %v1919 = vor.u32 %v1917, %v1918
    %v1920 = vshll.u32 2102212464, %v1908
    %v1921 = vshrl.u32 920167782, %v1909
    %v1922 = vor.u32 %v1920, %v1921
    %v1923 = vshll.u32 920167782, %v1908
    %v1924 = vshrl.u32 1326507024, %v1909
    %v1925 = vor.u32 %v1923, %v1924
    %vm1926 = vcmp.lt.s32.totalorder %v1907, 1
    %vm1927 = vcmp.lt.s32.totalorder %v1907, 2
    %vm1928 = vcmp.lt.s32.totalorder %v1907, 3
    %vm1929 = vcmp.lt.s32.totalorder %v1907, 4
    %v1930 = vsel %vm1926, %v1910, %v1913
    %v1931 = vsel %vm1929, %v1919, 2102212464
    %v1932 = vsel %vm1928, %v1916, %v1931
    %v1933 = vsel %vm1927, %v1930, %v1932
    %v1934 = vsel %vm1926, %v1913, %v1916
    %v1935 = vsel %vm1929, %v1922, 920167782
    %v1936 = vsel %vm1928, %v1919, %v1935
    %v1937 = vsel %vm1927, %v1934, %v1936
    %v1938 = vsel %vm1926, %v1916, %v1919
    %v1939 = vsel %vm1929, %v1925, 1326507024
    %v1940 = vsel %vm1928, %v1922, %v1939
    %v1941 = vsel %vm1927, %v1938, %v1940
    %v1942 = vshll.u32 %v1902, 8
    %v1943 = vmul.u32.u64.compose %v1942, %v1941
    %v1944 = vextract.low.u32 %v1943
    %v1945 = vextract.high.u32 %v1943
    %v1946 = vmul.u32.u64.compose %v1942, %v1937
    %v1947 = vextract.low.u32 %v1946
    %v1948 = vextract.high.u32 %v1946
    %v1949 = vmul.u32 %v1942, %v1933
    %v1950 = vadd.s32 %v1945, %v1947
    %vm1951 = vc.u32 %v1945, %v1947
    %v1952 = vadd.s32 %v1948, 1
    %v1953 = vsel %vm1951, %v1952, %v1948
    %v1954 = vadd.s32 %v1949, %v1953
    %v1955 = vadd.s32 %v1954, 536870912
    %v1956 = vshrl.u32 %v1955, 30
    %v1957 = vshll.u32 %v1956, 30
    %v1958 = vsub.s32 %v1954, %v1957
    %vm1959 = vcmp.lt.s32.totalorder %v1958, 0
    %v1960 = vsub.s32 0, %v1958
    %v1961 = vsel %vm1959, %v1960, %v1958
    %v1962 = vclz %v1961
    %v1963 = vsub.s32 %v1962, 2
    %vm1964 = vcmp.gt.s32.totalorder 0, %v1963
    %v1965 = vsel %vm1964, 0, %v1963
    %v1966 = vsub.s32 32, %v1965
    %v1967 = vshll.u32 %v1958, %v1965
    %v1968 = vshrl.u32 %v1950, %v1966
    %v1969 = vor.u32 %v1967, %v1968
    %v1970 = vsub.s32 4294967266, %v1965
    %v1971 = vadd.s32 %v1970, 127
    %v1972 = vshll.u32 %v1971, 23
    %v1973 = vor.u32 4788187, %v1972
    %v1974 = vand.u32 2147483647, %v1973
    %v1976 = vcvt.s32.f32 %v1969
    %v1977 = vmul.f32 %v1976, %v1974
    %v1978 = vxor.u32 %v1977, 2147483648
    %v1979 = vsel %vm1896, %v1978, %v1977
    %v1980 = vsub.s32 4, %v1956
    %v1981 = vsel %vm1896, %v1980, %v1956
    %v1982 = vsel %vm1895, %v1893, %v1979
    %v1983 = vsel %vm1895, 0, %v1981
    %v1984 = vcosq.f32.pop %v1982
    %v1985 = vsinq.f32.pop %v1982
    %vm1986 = vweird.f32 %v1893
    %v1987 = vadd.s32 %v1983, 3
    %v1988 = vand.u32 %v1987, 3
    %vm1989 = vcmp.lt.s32.totalorder %v1988, 2
    %vm1990 = vcmp.eq.s32.totalorder %v1988, 0
    %v1991 = vxor.u32 %v1985, 2147483648
    %v1992 = vsel %vm1990, %v1984, %v1991
    %vm1993 = vcmp.eq.s32.totalorder %v1988, 2
    %v1994 = vxor.u32 %v1984, 2147483648
    %v1995 = vsel %vm1993, %v1994, %v1985
    %v1996 = vsel %vm1989, %v1992, %v1995
    %v1997 = vsel %vm1986, nan, %v1996
    %v1998 = vand.u32 2147483647, %v1893
    %vm1999 = vcmp.le.f32.partialorder %v1998, 0.7853982
    %vm2000 = vcmp.lt.s32.totalorder %v1893, 0
    %v2001 = vand.u32 %v1893, 2139095040
    %v2002 = vshrl.u32 %v2001, 23
    %v2003 = vsub.s32 %v2002, 127
    %v2004 = vand.u32 2147483647, %v1893
    %v2005 = vand.u32 %v2004, 8388607
    %v2006 = vor.u32 %v2005, 8388608
    %v2007 = vsub.s32 0, %v2006
    %v2008 = vadd.s32 %v2003, 1
    %vm2009 = vcmp.gt.s32.totalorder %v2008, 0
    %v2010 = vsel %vm2009, %v2008, 0
    %v2011 = vshrl.u32 %v2010, 5
    %v2012 = vand.u32 %v2010, 31
    %v2013 = vsub.s32 32, %v2012
    %v2014 = vshrl.u32 683565275, %v2013
    %v2015 = vshll.u32 683565275, %v2012
    %v2016 = vshrl.u32 2475754826, %v2013
    %v2017 = vor.u32 %v2015, %v2016
    %v2018 = vshll.u32 2475754826, %v2012
    %v2019 = vshrl.u32 2131351028, %v2013
    %v2020 = vor.u32 %v2018, %v2019
    %v2021 = vshll.u32 2131351028, %v2012
    %v2022 = vshrl.u32 2102212464, %v2013
    %v2023 = vor.u32 %v2021, %v2022
    %v2024 = vshll.u32 2102212464, %v2012
    %v2025 = vshrl.u32 920167782, %v2013
    %v2026 = vor.u32 %v2024, %v2025
    %v2027 = vshll.u32 920167782, %v2012
    %v2028 = vshrl.u32 1326507024, %v2013
    %v2029 = vor.u32 %v2027, %v2028
    %vm2030 = vcmp.lt.s32.totalorder %v2011, 1
    %vm2031 = vcmp.lt.s32.totalorder %v2011, 2
    %vm2032 = vcmp.lt.s32.totalorder %v2011, 3
    %vm2033 = vcmp.lt.s32.totalorder %v2011, 4
    %v2034 = vsel %vm2030, %v2014, %v2017
    %v2035 = vsel %vm2033, %v2023, 2102212464
    %v2036 = vsel %vm2032, %v2020, %v2035
    %v2037 = vsel %vm2031, %v2034, %v2036
    %v2038 = vsel %vm2030, %v2017, %v2020
    %v2039 = vsel %vm2033, %v2026, 920167782
    %v2040 = vsel %vm2032, %v2023, %v2039
    %v2041 = vsel %vm2031, %v2038, %v2040
    %v2042 = vsel %vm2030, %v2020, %v2023
    %v2043 = vsel %vm2033, %v2029, 1326507024
    %v2044 = vsel %vm2032, %v2026, %v2043
    %v2045 = vsel %vm2031, %v2042, %v2044
    %v2046 = vshll.u32 %v2006, 8
    %v2047 = vmul.u32.u64.compose %v2046, %v2045
    %v2048 = vextract.low.u32 %v2047
    %v2049 = vextract.high.u32 %v2047
    %v2050 = vmul.u32.u64.compose %v2046, %v2041
    %v2051 = vextract.low.u32 %v2050
    %v2052 = vextract.high.u32 %v2050
    %v2053 = vmul.u32 %v2046, %v2037
    %v2054 = vadd.s32 %v2049, %v2051
    %vm2055 = vc.u32 %v2049, %v2051
    %v2056 = vadd.s32 %v2052, 1
    %v2057 = vsel %vm2055, %v2056, %v2052
    %v2058 = vadd.s32 %v2053, %v2057
    %v2059 = vadd.s32 %v2058, 536870912
    %v2060 = vshrl.u32 %v2059, 30
    %v2061 = vshll.u32 %v2060, 30
    %v2062 = vsub.s32 %v2058, %v2061
    %vm2063 = vcmp.lt.s32.totalorder %v2062, 0
    %v2064 = vsub.s32 0, %v2062
    %v2065 = vsel %vm2063, %v2064, %v2062
    %v2066 = vclz %v2065
    %v2067 = vsub.s32 %v2066, 2
    %vm2068 = vcmp.gt.s32.totalorder 0, %v2067
    %v2069 = vsel %vm2068, 0, %v2067
    %v2070 = vsub.s32 32, %v2069
    %v2071 = vshll.u32 %v2062, %v2069
    %v2072 = vshrl.u32 %v2054, %v2070
    %v2073 = vor.u32 %v2071, %v2072
    %v2074 = vsub.s32 4294967266, %v2069
    %v2075 = vadd.s32 %v2074, 127
    %v2076 = vshll.u32 %v2075, 23
    %v2077 = vor.u32 4788187, %v2076
    %v2078 = vand.u32 2147483647, %v2077
    %v2080 = vcvt.s32.f32 %v2073
    %v2081 = vmul.f32 %v2080, %v2078
    %v2082 = vxor.u32 %v2081, 2147483648
    %v2083 = vsel %vm2000, %v2082, %v2081
    %v2084 = vsub.s32 4, %v2060
    %v2085 = vsel %vm2000, %v2084, %v2060
    %v2086 = vsel %vm1999, %v1893, %v2083
    %v2087 = vsel %vm1999, 0, %v2085
    %v2088 = vcosq.f32.pop %v2086
    %v2089 = vsinq.f32.pop %v2086
    %vm2090 = vweird.f32 %v1893
    %v2091 = vand.u32 %v2087, 3
    %vm2092 = vcmp.lt.s32.totalorder %v2091, 2
    %vm2093 = vcmp.eq.s32.totalorder %v2091, 0
    %v2094 = vxor.u32 %v2089, 2147483648
    %v2095 = vsel %vm2093, %v2088, %v2094
    %vm2096 = vcmp.eq.s32.totalorder %v2091, 2
    %v2097 = vxor.u32 %v2088, 2147483648
    %v2098 = vsel %vm2096, %v2097, %v2089
    %v2099 = vsel %vm2092, %v2095, %v2098
    %v2100 = vsel %vm2090, nan, %v2099
    %v2102 = vcombine.high %v21, %v21
    %v2105 = vcombine.high %v125, %v125
    %v2106 = vrot.slane %v125, 5
    %v2107 = vrot.slane %v2105, 5
    %v2111 = vcombine.high %v228, %v228
    %v2112 = vrot.slane %v228, 2
    %v2113 = vrot.slane %v2111, 2
    %v2117 = vcombine.high %v333, %v333
    %v2118 = vrot.slane %v333, 7
    %v2119 = vrot.slane %v2117, 7
    %v2123 = vcombine.low %v436, %v436
    %v2126 = vcombine.high %v541, %v541
    %v2127 = vrot.slane %v541, 1
    %v2128 = vrot.slane %v2126, 1
    %v2132 = vcombine.high %v644, %v644
    %v2133 = vrot.slane %v644, 6
    %v2134 = vrot.slane %v2132, 6
    %v2138 = vcombine.high %v749, %v749
    %v2139 = vrot.slane %v749, 3
    %v2140 = vrot.slane %v2138, 3
    %v2144 = vcombine.high %v852, %v852
    %v2147 = vcombine.high %v957, %v957
    %v2148 = vrot.slane %v957, 5
    %v2149 = vrot.slane %v2147, 5
    %v2153 = vcombine.high %v1060, %v1060
    %v2154 = vrot.slane %v1060, 2
    %v2155 = vrot.slane %v2153, 2
    %v2159 = vcombine.high %v1165, %v1165
    %v2160 = vrot.slane %v1165, 7
    %v2161 = vrot.slane %v2159, 7
    %v2165 = vcombine.low %v1268, %v1268
    %v2168 = vcombine.high %v1373, %v1373
    %v2169 = vrot.slane %v1373, 1
    %v2170 = vrot.slane %v2168, 1
    %v2174 = vcombine.high %v1476, %v1476
    %v2175 = vrot.slane %v1476, 6
    %v2176 = vrot.slane %v2174, 6
    %v2180 = vcombine.high %v1581, %v1581
    %v2181 = vrot.slane %v1581, 3
    %v2182 = vrot.slane %v2180, 3
    %vm2185 = vcmask 1042432
    %v2186 = vsel %vm2185, %v21, %v2106
    %v2187 = vsel %vm2185, %v2102, %v2107
    %vm2188 = vcmask 1045504
    %v2189 = vsel %vm2188, %v2186, %v2112
    %v2190 = vsel %vm2188, %v2187, %v2113
    %vm2191 = vcmask 1040384
    %v2192 = vsel %vm2191, %v2112, %v2118
    %v2193 = vsel %vm2191, %v2113, %v2119
    %vm2194 = vcmask 1043456
    %v2195 = vsel %vm2194, %v2192, %v2123
    %v2196 = vsel %vm2194, %v2193, %v436
    %vm2197 = vcmask 1046528
    %v2198 = vsel %vm2197, %v2195, %v2127
    %v2199 = vsel %vm2197, %v2196, %v2128
    %vm2200 = vcmask 1041408
    %v2201 = vsel %vm2200, %v2127, %v2133
    %v2202 = vsel %vm2200, %v2128, %v2134
    %vm2203 = vcmask 1044480
    %v2204 = vsel %vm2203, %v2201, %v2139
    %v2205 = vsel %vm2203, %v2202, %v2140
    %v2206 = vsel %vm2185, %v852, %v2148
    %v2207 = vsel %vm2185, %v2144, %v2149
    %v2208 = vsel %vm2188, %v2206, %v2154
    %v2209 = vsel %vm2188, %v2207, %v2155
    %v2210 = vsel %vm2191, %v2154, %v2160
    %v2211 = vsel %vm2191, %v2155, %v2161
    %v2212 = vsel %vm2194, %v2210, %v2165
    %v2213 = vsel %vm2194, %v2211, %v1268
    %v2214 = vsel %vm2197, %v2212, %v2169
    %v2215 = vsel %vm2197, %v2213, %v2170
    %v2216 = vsel %vm2200, %v2169, %v2175
    %v2217 = vsel %vm2200, %v2170, %v2176
    %v2218 = vsel %vm2203, %v2216, %v2181
    %v2219 = vsel %vm2203, %v2217, %v2182
    %v2221 = vcombine.high %v1684, %v1684
    %v2224 = vcombine.high %v1789, %v1789
    %v2225 = vrot.slane %v1789, 5
    %v2226 = vrot.slane %v2224, 5
    %v2230 = vcombine.high %v1892, %v1892
    %v2231 = vrot.slane %v1892, 2
    %v2232 = vrot.slane %v2230, 2
    %v2236 = vcombine.high %v1997, %v1997
    %v2237 = vrot.slane %v1997, 7
    %v2238 = vrot.slane %v2236, 7
    %v2242 = vcombine.low %v2100, %v2100
    %v2244 = vsel %vm2185, %v1684, %v2225
    %v2245 = vsel %vm2185, %v2221, %v2226
    %v2246 = vsel %vm2188, %v2244, %v2231
    %v2247 = vsel %vm2188, %v2245, %v2232
    %v2248 = vsel %vm2191, %v2231, %v2237
    %v2249 = vsel %vm2191, %v2232, %v2238
    %v2250 = vsel %vm2194, %v2248, %v2242
    %v2251 = vsel %vm2194, %v2249, %v2100
    %2252 = vst [vmem:[#allocation5] sm:$0xff] %v2189
    %2253 = vst [vmem:[#allocation5 + $0x8] sm:$0xff] %v2190
    %2254 = vst [vmem:[#allocation5 + $0x10] sm:$0xff] %v2198
    %2255 = vst [vmem:[#allocation5 + $0x18] sm:$0xff] %v2199
    %2256 = vst [vmem:[#allocation5 + $0x20] sm:$0xff] %v2204
    %2257 = vst [vmem:[#allocation5 + $0x28] sm:$0xff] %v2205
    %2258 = vst [vmem:[#allocation5 + $0x30] sm:$0xff] %v2208
    %2259 = vst [vmem:[#allocation5 + $0x38] sm:$0xff] %v2209
    %2260 = vst [vmem:[#allocation5 + $0x40] sm:$0xff] %v2214
    %2261 = vst [vmem:[#allocation5 + $0x48] sm:$0xff] %v2215
    %2262 = vst [vmem:[#allocation5 + $0x50] sm:$0xff] %v2218
    %2263 = vst [vmem:[#allocation5 + $0x58] sm:$0xff] %v2219
    %2264 = vst [vmem:[#allocation5 + $0x60] sm:$0xff] %v2246
    %2265 = vst [vmem:[#allocation5 + $0x68] sm:$0xff] %v2247
    %2266 = vst [vmem:[#allocation5 + $0x70] sm:$0x7f] %v2250
    %2267 = vst [vmem:[#allocation5 + $0x78] sm:$0x7f] %v2251
    // Predicated region
    $region10: #{tpu_custom_call.1} parent=1 // pred_check
      _
    $region11: #{tpu_custom_call.1} parent=1 // pred_check_branch
      %2269 = sbr.rel (0) target = $region13
    $region12: #{tpu_custom_call.1} parent=1 // pred_region
      %s2271 = ssub.s32 2048, 2048
      %2272 = vsyncadd [#allocation4], %s2271
      %s2273 = sshll.u32 [#allocation5], 4
      %s2274 = int_to_ptr.vmem [resolvable:$true] %s2273
      %2279 = dma.vmem_to_hbm [thread:$0]  %s2274, 2048, %s1, [#allocation4], 256, 256, 16
    $region13: #{tpu_custom_call.1} parent=1 // pred_fallthru
      _
    // Predicated region
    $region14: #{tpu_custom_call.1} parent=1 // pred_check
      _
    $region15: #{tpu_custom_call.1} parent=1 // pred_check_branch
      %2281 = sbr.rel (0) target = $region17
    $region16: #{tpu_custom_call.1} parent=1 // pred_region
      %2282 = dma.done [#allocation4], 2048
    $region17: #{tpu_custom_call.1} parent=1 // pred_fallthru
      _
    %2283 = vsyncpa [#allocation3], 1
    %2284 = vsyncpa [#allocation4], 1

</llo_original>
